<compile_context>
chip_gen: v7x
topology: tpu7x:2x2x1
jax: 0.10.0
libtpu: 0.0.40
codegen_flags: <defaults>
</compile_context>

<pallas_src>
import functools

import jax
import jax.numpy as jnp
from jax.experimental import pallas as pl
from jax.experimental.pallas import tpu as pltpu


def _basic_block_kernel(x_ref, mask_ref, w1_ref, b1_ref, w2_ref, b2_ref,
                        o_ref, mid_ref, *, H, W, left):
  """One batch element per grid step.

  x_ref   : (Cin, L)        flattened zero-padded image rows + zero margins
  mask_ref: (1, P)          1.0 at valid (interior) padded positions, else 0.0
  w1_ref  : (Cout, Cin*9)   conv1 weights, bn1 scale folded in, idx = ci*9 + tap
  b1_ref  : (Cout, 1)       bn1 folded bias
  w2_ref  : (Cout, Cout*9)  conv2 weights, bn2 scale folded in
  b2_ref  : (Cout, 1)       bn2 folded bias
  o_ref   : (Cout, P)       output in padded-flat frame (wrapper crops interior)
  mid_ref : (Cout, L)       small VMEM scratch for the conv1 output rows
  """
  Hp, Wp = H + 2, W + 2
  P = Hp * Wp
  Cin, L = x_ref.shape
  Cout = o_ref.shape[0]

  # Flat offsets of the 9 conv taps relative to an output pixel in the
  # zero-padded (Hp, Wp) frame.
  offs = [(dy - 1) * Wp + (dx - 1) for dy in range(3) for dx in range(3)]

  def conv3x3(src_ref, w_ref, cin):
    # src_ref rows: image occupies [left, left+P); margins are zero.
    acc = None
    for t, o in enumerate(offs):
      block = src_ref[:, left + o:left + o + P]            # (cin, P) shifted tap
      for ci in range(cin):
        row = block[ci:ci + 1, :]                          # (1, P)
        col = w_ref[:, ci * 9 + t:ci * 9 + t + 1]          # (Cout, 1)
        term = row * col                                   # (Cout, P) outer FMA
        acc = term if acc is None else acc + term          # init from first tap
    return acc

  mask = mask_ref[...]                                     # (1, P)

  # ---- conv1 + folded bn1 + relu -> zero-padded intermediate rows ----
  out1 = jnp.maximum(conv3x3(x_ref, w1_ref, Cin) + b1_ref[...], 0.0) * mask
  # zero only the margins of the (tiny) scratch, then write the interior once.
  mid_ref[:, :left] = jnp.zeros((Cout, left), jnp.float32)
  mid_ref[:, left + P:L] = jnp.zeros((Cout, L - left - P), jnp.float32)
  mid_ref[:, left:left + P] = out1

  # ---- conv2 + folded bn2 + residual add + relu ----
  identity = x_ref[:, left:left + P]                       # (Cin == Cout, P)
  out = conv3x3(mid_ref, w2_ref, Cout) + b2_ref[...] + identity
  o_ref[...] = jnp.maximum(out, 0.0) * mask


def _round_up(x, m):
  return ((x + m - 1) // m) * m


def _fold_bn(gamma, beta, mean, var, eps=1e-5):
  scale = gamma / jnp.sqrt(var + eps)
  bias = beta - mean * scale
  return scale, bias


@jax.jit
def basic_block_forward(x_nchw, w1_oihw, bn1, w2_oihw, bn2):
  """BasicBlock forward. x_nchw: (N, C, H, W) float32 (PyTorch layout)."""
  x = x_nchw.astype(jnp.float32)
  N, Cin, H, W = x.shape
  Cout = w1_oihw.shape[0]
  assert Cin == Cout, "downsample=None requires inplanes == planes"

  Hp, Wp = H + 2, W + 2
  P = Hp * Wp
  left = _round_up(Wp + 1, 128)              # lane-aligned left margin >= Wp+1
  L = _round_up(left + P + (Wp + 1), 128)    # total row length, lane-aligned

  # ---- wrapper-side glue: pad spatially, flatten, add flat margins ----
  xpad = jnp.pad(x, ((0, 0), (0, 0), (1, 1), (1, 1)))             # (N,C,Hp,Wp)
  xext = jnp.pad(xpad.reshape(N, Cin, P),
                 ((0, 0), (0, 0), (left, L - left - P)))          # (N,C,L)

  # ---- fold BN (eval mode) into conv weights / bias ----
  s1, b1 = _fold_bn(*bn1)
  s2, b2 = _fold_bn(*bn2)
  w1 = (w1_oihw.astype(jnp.float32) * s1[:, None, None, None]).reshape(Cout, Cin * 9)
  w2 = (w2_oihw.astype(jnp.float32) * s2[:, None, None, None]).reshape(Cout, Cout * 9)
  b1 = b1.reshape(Cout, 1).astype(jnp.float32)
  b2 = b2.reshape(Cout, 1).astype(jnp.float32)

  # ---- validity mask over the padded (Hp, Wp) frame, flattened ----
  yy = (jnp.arange(Hp) >= 1) & (jnp.arange(Hp) <= H)
  xx = (jnp.arange(Wp) >= 1) & (jnp.arange(Wp) <= W)
  mask = (yy[:, None] & xx[None, :]).reshape(1, P).astype(jnp.float32)

  kernel = functools.partial(_basic_block_kernel, H=H, W=W, left=left)

  out_flat = pl.pallas_call(
      kernel,
      out_shape=jax.ShapeDtypeStruct((N, Cout, P), jnp.float32),
      grid=(N,),
      in_specs=[
          pl.BlockSpec((None, Cin, L), lambda n: (n, 0, 0)),      # x (per batch)
          pl.BlockSpec((1, P), lambda n: (0, 0)),                 # interior mask
          pl.BlockSpec((Cout, Cin * 9), lambda n: (0, 0)),        # w1 (bn folded)
          pl.BlockSpec((Cout, 1), lambda n: (0, 0)),              # b1
          pl.BlockSpec((Cout, Cout * 9), lambda n: (0, 0)),       # w2 (bn folded)
          pl.BlockSpec((Cout, 1), lambda n: (0, 0)),              # b2
      ],
      out_specs=pl.BlockSpec((None, Cout, P), lambda n: (n, 0, 0)),
      scratch_shapes=[pltpu.VMEM((Cout, L), jnp.float32)],
      compiler_params=pltpu.CompilerParams(
          dimension_semantics=("parallel",),
          vmem_limit_bytes=32 * 1024 * 1024),
  )(xext, mask, w1, b1, w2, b2)

  out = out_flat.reshape(N, Cout, Hp, Wp)[:, :, 1:H + 1, 1:W + 1]
  return out


def _reference_forward(x_nchw, w1_oihw, bn1, w2_oihw, bn2):
  """Pure-JAX reference (lax.conv) for correctness checking."""
  def conv(x, w_oihw):
    return jax.lax.conv_general_dilated(
        x, w_oihw, window_strides=(1, 1), padding=((1, 1), (1, 1)),
        dimension_numbers=('NCHW', 'OIHW', 'NCHW'),
        precision=jax.lax.Precision.HIGHEST)

  def bn(x, params):
    g, b, m, v = params
    s = g / jnp.sqrt(v + 1e-5)
    return x * s[None, :, None, None] + (b - m * s)[None, :, None, None]

  out = jax.nn.relu(bn(conv(x_nchw, w1_oihw), bn1))
  out = bn(conv(out, w2_oihw), bn2)
  return jax.nn.relu(out + x_nchw)


if __name__ == "__main__":
  key = jax.random.PRNGKey(0)
  kx, kw1, kw2, kg1, kb1, km1, kv1, kg2, kb2, km2, kv2 = jax.random.split(key, 11)

  N, C, H, W = 2, 4, 16, 16          # inplanes = planes = 4, stride = 1
  x = jax.random.normal(kx, (N, C, H, W), jnp.float32)

  w1 = jax.random.normal(kw1, (C, C, 3, 3), jnp.float32) * 0.2   # OIHW
  w2 = jax.random.normal(kw2, (C, C, 3, 3), jnp.float32) * 0.2   # OIHW

  bn1 = (1.0 + 0.1 * jax.random.normal(kg1, (C,), jnp.float32),  # gamma
         0.1 * jax.random.normal(kb1, (C,), jnp.float32),        # beta
         0.1 * jax.random.normal(km1, (C,), jnp.float32),        # running_mean
         1.0 + 0.1 * jax.random.uniform(kv1, (C,), jnp.float32)) # running_var
  bn2 = (1.0 + 0.1 * jax.random.normal(kg2, (C,), jnp.float32),
         0.1 * jax.random.normal(kb2, (C,), jnp.float32),
         0.1 * jax.random.normal(km2, (C,), jnp.float32),
         1.0 + 0.1 * jax.random.uniform(kv2, (C,), jnp.float32))

  out = jax.block_until_ready(basic_block_forward(x, w1, bn1, w2, bn2))

  ref = jax.block_until_ready(_reference_forward(x, w1, bn1, w2, bn2))
  assert out.shape == (N, C, H, W), out.shape
  err = float(jnp.max(jnp.abs(out - ref)))
  assert jnp.allclose(out, ref, atol=1e-4, rtol=1e-4), err

  print("KERNEL_OK")
</pallas_src>

<mosaic_0001>
module attributes {stable_mosaic.version = 11 : i64} {
  func.func @_basic_block_kernel(%arg0: i32, %arg1: memref<1x4x512xf32, #tpu.memory_space<vmem>>, %arg2: memref<1x324xf32, #tpu.memory_space<vmem>>, %arg3: memref<4x36xf32, #tpu.memory_space<vmem>>, %arg4: memref<4x1xf32, #tpu.memory_space<vmem>>, %arg5: memref<4x36xf32, #tpu.memory_space<vmem>>, %arg6: memref<4x1xf32, #tpu.memory_space<vmem>>, %arg7: memref<1x4x324xf32, #tpu.memory_space<vmem>>, %arg8: memref<4x512xf32, #tpu.memory_space<vmem>>) attributes {dimension_semantics = [#tpu.dimension_semantics<parallel>], iteration_bounds = array<i64: 2>, scalar_prefetch = 0 : i64, scratch_operands = 1 : i64, tpu.core_type = #tpu.core_type<tc>, window_params = [{transform_indices = @transform_0, window_bounds = array<i64: 1, 4, 512>}, {pipeline_mode = #tpu.pipeline_mode<synchronous>, transform_indices = @transform_1, window_bounds = array<i64: 1, 324>}, {pipeline_mode = #tpu.pipeline_mode<synchronous>, transform_indices = @transform_2, window_bounds = array<i64: 4, 36>}, {pipeline_mode = #tpu.pipeline_mode<synchronous>, transform_indices = @transform_3, window_bounds = array<i64: 4, 1>}, {pipeline_mode = #tpu.pipeline_mode<synchronous>, transform_indices = @transform_4, window_bounds = array<i64: 4, 36>}, {pipeline_mode = #tpu.pipeline_mode<synchronous>, transform_indices = @transform_5, window_bounds = array<i64: 4, 1>}, {transform_indices = @transform_6, window_bounds = array<i64: 1, 4, 324>}]} {
    %c0 = arith.constant 0 : index
    %c0_0 = arith.constant 0 : index
    %0 = vector.load %arg2[%c0, %c0_0] : memref<1x324xf32, #tpu.memory_space<vmem>>, vector<1x324xf32>
    %c0_1 = arith.constant 0 : index
    %c0_2 = arith.constant 0 : index
    %c109 = arith.constant 109 : index
    %1 = vector.load %arg1[%c0_1, %c0_2, %c109] : memref<1x4x512xf32, #tpu.memory_space<vmem>>, vector<1x4x324xf32>
    %2 = vector.shape_cast %1 : vector<1x4x324xf32> to vector<4x324xf32>
    %3 = vector.extract_strided_slice %2 {offsets = [0, 0], sizes = [1, 324], strides = [1, 1]} : vector<4x324xf32> to vector<1x324xf32>
    %c0_3 = arith.constant 0 : index
    %c0_4 = arith.constant 0 : index
    %4 = vector.load %arg3[%c0_3, %c0_4] : memref<4x36xf32, #tpu.memory_space<vmem>>, vector<4x1xf32>
    %5 = vector.broadcast %3 : vector<1x324xf32> to vector<4x324xf32>
    %6 = vector.broadcast %4 : vector<4x1xf32> to vector<4x324xf32>
    %7 = arith.mulf %5, %6 : vector<4x324xf32>
    %8 = vector.extract_strided_slice %2 {offsets = [1, 0], sizes = [1, 324], strides = [1, 1]} : vector<4x324xf32> to vector<1x324xf32>
    %c0_5 = arith.constant 0 : index
    %c9 = arith.constant 9 : index
    %9 = vector.load %arg3[%c0_5, %c9] : memref<4x36xf32, #tpu.memory_space<vmem>>, vector<4x1xf32>
    %10 = vector.broadcast %8 : vector<1x324xf32> to vector<4x324xf32>
    %11 = vector.broadcast %9 : vector<4x1xf32> to vector<4x324xf32>
    %12 = arith.mulf %10, %11 : vector<4x324xf32>
    %13 = arith.addf %7, %12 : vector<4x324xf32>
    %14 = vector.extract_strided_slice %2 {offsets = [2, 0], sizes = [1, 324], strides = [1, 1]} : vector<4x324xf32> to vector<1x324xf32>
    %c0_6 = arith.constant 0 : index
    %c18 = arith.constant 18 : index
    %15 = vector.load %arg3[%c0_6, %c18] : memref<4x36xf32, #tpu.memory_space<vmem>>, vector<4x1xf32>
    %16 = vector.broadcast %14 : vector<1x324xf32> to vector<4x324xf32>
    %17 = vector.broadcast %15 : vector<4x1xf32> to vector<4x324xf32>
    %18 = arith.mulf %16, %17 : vector<4x324xf32>
    %19 = arith.addf %13, %18 : vector<4x324xf32>
    %20 = vector.extract_strided_slice %2 {offsets = [3, 0], sizes = [1, 324], strides = [1, 1]} : vector<4x324xf32> to vector<1x324xf32>
    %c0_7 = arith.constant 0 : index
    %c27 = arith.constant 27 : index
    %21 = vector.load %arg3[%c0_7, %c27] : memref<4x36xf32, #tpu.memory_space<vmem>>, vector<4x1xf32>
    %22 = vector.broadcast %20 : vector<1x324xf32> to vector<4x324xf32>
    %23 = vector.broadcast %21 : vector<4x1xf32> to vector<4x324xf32>
    %24 = arith.mulf %22, %23 : vector<4x324xf32>
    %25 = arith.addf %19, %24 : vector<4x324xf32>
    %c0_8 = arith.constant 0 : index
    %c0_9 = arith.constant 0 : index
    %c110 = arith.constant 110 : index
    %26 = vector.load %arg1[%c0_8, %c0_9, %c110] : memref<1x4x512xf32, #tpu.memory_space<vmem>>, vector<1x4x324xf32>
    %27 = vector.shape_cast %26 : vector<1x4x324xf32> to vector<4x324xf32>
    %28 = vector.extract_strided_slice %27 {offsets = [0, 0], sizes = [1, 324], strides = [1, 1]} : vector<4x324xf32> to vector<1x324xf32>
    %c0_10 = arith.constant 0 : index
    %c1 = arith.constant 1 : index
    %29 = vector.load %arg3[%c0_10, %c1] : memref<4x36xf32, #tpu.memory_space<vmem>>, vector<4x1xf32>
    %30 = vector.broadcast %28 : vector<1x324xf32> to vector<4x324xf32>
    %31 = vector.broadcast %29 : vector<4x1xf32> to vector<4x324xf32>
    %32 = arith.mulf %30, %31 : vector<4x324xf32>
    %33 = arith.addf %25, %32 : vector<4x324xf32>
    %34 = vector.extract_strided_slice %27 {offsets = [1, 0], sizes = [1, 324], strides = [1, 1]} : vector<4x324xf32> to vector<1x324xf32>
    %c0_11 = arith.constant 0 : index
    %c10 = arith.constant 10 : index
    %35 = vector.load %arg3[%c0_11, %c10] : memref<4x36xf32, #tpu.memory_space<vmem>>, vector<4x1xf32>
    %36 = vector.broadcast %34 : vector<1x324xf32> to vector<4x324xf32>
    %37 = vector.broadcast %35 : vector<4x1xf32> to vector<4x324xf32>
    %38 = arith.mulf %36, %37 : vector<4x324xf32>
    %39 = arith.addf %33, %38 : vector<4x324xf32>
    %40 = vector.extract_strided_slice %27 {offsets = [2, 0], sizes = [1, 324], strides = [1, 1]} : vector<4x324xf32> to vector<1x324xf32>
    %c0_12 = arith.constant 0 : index
    %c19 = arith.constant 19 : index
    %41 = vector.load %arg3[%c0_12, %c19] : memref<4x36xf32, #tpu.memory_space<vmem>>, vector<4x1xf32>
    %42 = vector.broadcast %40 : vector<1x324xf32> to vector<4x324xf32>
    %43 = vector.broadcast %41 : vector<4x1xf32> to vector<4x324xf32>
    %44 = arith.mulf %42, %43 : vector<4x324xf32>
    %45 = arith.addf %39, %44 : vector<4x324xf32>
    %46 = vector.extract_strided_slice %27 {offsets = [3, 0], sizes = [1, 324], strides = [1, 1]} : vector<4x324xf32> to vector<1x324xf32>
    %c0_13 = arith.constant 0 : index
    %c28 = arith.constant 28 : index
    %47 = vector.load %arg3[%c0_13, %c28] : memref<4x36xf32, #tpu.memory_space<vmem>>, vector<4x1xf32>
    %48 = vector.broadcast %46 : vector<1x324xf32> to vector<4x324xf32>
    %49 = vector.broadcast %47 : vector<4x1xf32> to vector<4x324xf32>
    %50 = arith.mulf %48, %49 : vector<4x324xf32>
    %51 = arith.addf %45, %50 : vector<4x324xf32>
    %c0_14 = arith.constant 0 : index
    %c0_15 = arith.constant 0 : index
    %c111 = arith.constant 111 : index
    %52 = vector.load %arg1[%c0_14, %c0_15, %c111] : memref<1x4x512xf32, #tpu.memory_space<vmem>>, vector<1x4x324xf32>
    %53 = vector.shape_cast %52 : vector<1x4x324xf32> to vector<4x324xf32>
    %54 = vector.extract_strided_slice %53 {offsets = [0, 0], sizes = [1, 324], strides = [1, 1]} : vector<4x324xf32> to vector<1x324xf32>
    %c0_16 = arith.constant 0 : index
    %c2 = arith.constant 2 : index
    %55 = vector.load %arg3[%c0_16, %c2] : memref<4x36xf32, #tpu.memory_space<vmem>>, vector<4x1xf32>
    %56 = vector.broadcast %54 : vector<1x324xf32> to vector<4x324xf32>
    %57 = vector.broadcast %55 : vector<4x1xf32> to vector<4x324xf32>
    %58 = arith.mulf %56, %57 : vector<4x324xf32>
    %59 = arith.addf %51, %58 : vector<4x324xf32>
    %60 = vector.extract_strided_slice %53 {offsets = [1, 0], sizes = [1, 324], strides = [1, 1]} : vector<4x324xf32> to vector<1x324xf32>
    %c0_17 = arith.constant 0 : index
    %c11 = arith.constant 11 : index
    %61 = vector.load %arg3[%c0_17, %c11] : memref<4x36xf32, #tpu.memory_space<vmem>>, vector<4x1xf32>
    %62 = vector.broadcast %60 : vector<1x324xf32> to vector<4x324xf32>
    %63 = vector.broadcast %61 : vector<4x1xf32> to vector<4x324xf32>
    %64 = arith.mulf %62, %63 : vector<4x324xf32>
    %65 = arith.addf %59, %64 : vector<4x324xf32>
    %66 = vector.extract_strided_slice %53 {offsets = [2, 0], sizes = [1, 324], strides = [1, 1]} : vector<4x324xf32> to vector<1x324xf32>
    %c0_18 = arith.constant 0 : index
    %c20 = arith.constant 20 : index
    %67 = vector.load %arg3[%c0_18, %c20] : memref<4x36xf32, #tpu.memory_space<vmem>>, vector<4x1xf32>
    %68 = vector.broadcast %66 : vector<1x324xf32> to vector<4x324xf32>
    %69 = vector.broadcast %67 : vector<4x1xf32> to vector<4x324xf32>
    %70 = arith.mulf %68, %69 : vector<4x324xf32>
    %71 = arith.addf %65, %70 : vector<4x324xf32>
    %72 = vector.extract_strided_slice %53 {offsets = [3, 0], sizes = [1, 324], strides = [1, 1]} : vector<4x324xf32> to vector<1x324xf32>
    %c0_19 = arith.constant 0 : index
    %c29 = arith.constant 29 : index
    %73 = vector.load %arg3[%c0_19, %c29] : memref<4x36xf32, #tpu.memory_space<vmem>>, vector<4x1xf32>
    %74 = vector.broadcast %72 : vector<1x324xf32> to vector<4x324xf32>
    %75 = vector.broadcast %73 : vector<4x1xf32> to vector<4x324xf32>
    %76 = arith.mulf %74, %75 : vector<4x324xf32>
    %77 = arith.addf %71, %76 : vector<4x324xf32>
    %c0_20 = arith.constant 0 : index
    %c0_21 = arith.constant 0 : index
    %c127 = arith.constant 127 : index
    %78 = vector.load %arg1[%c0_20, %c0_21, %c127] : memref<1x4x512xf32, #tpu.memory_space<vmem>>, vector<1x4x324xf32>
    %79 = vector.shape_cast %78 : vector<1x4x324xf32> to vector<4x324xf32>
    %80 = vector.extract_strided_slice %79 {offsets = [0, 0], sizes = [1, 324], strides = [1, 1]} : vector<4x324xf32> to vector<1x324xf32>
    %c0_22 = arith.constant 0 : index
    %c3 = arith.constant 3 : index
    %81 = vector.load %arg3[%c0_22, %c3] : memref<4x36xf32, #tpu.memory_space<vmem>>, vector<4x1xf32>
    %82 = vector.broadcast %80 : vector<1x324xf32> to vector<4x324xf32>
    %83 = vector.broadcast %81 : vector<4x1xf32> to vector<4x324xf32>
    %84 = arith.mulf %82, %83 : vector<4x324xf32>
    %85 = arith.addf %77, %84 : vector<4x324xf32>
    %86 = vector.extract_strided_slice %79 {offsets = [1, 0], sizes = [1, 324], strides = [1, 1]} : vector<4x324xf32> to vector<1x324xf32>
    %c0_23 = arith.constant 0 : index
    %c12 = arith.constant 12 : index
    %87 = vector.load %arg3[%c0_23, %c12] : memref<4x36xf32, #tpu.memory_space<vmem>>, vector<4x1xf32>
    %88 = vector.broadcast %86 : vector<1x324xf32> to vector<4x324xf32>
    %89 = vector.broadcast %87 : vector<4x1xf32> to vector<4x324xf32>
    %90 = arith.mulf %88, %89 : vector<4x324xf32>
    %91 = arith.addf %85, %90 : vector<4x324xf32>
    %92 = vector.extract_strided_slice %79 {offsets = [2, 0], sizes = [1, 324], strides = [1, 1]} : vector<4x324xf32> to vector<1x324xf32>
    %c0_24 = arith.constant 0 : index
    %c21 = arith.constant 21 : index
    %93 = vector.load %arg3[%c0_24, %c21] : memref<4x36xf32, #tpu.memory_space<vmem>>, vector<4x1xf32>
    %94 = vector.broadcast %92 : vector<1x324xf32> to vector<4x324xf32>
    %95 = vector.broadcast %93 : vector<4x1xf32> to vector<4x324xf32>
    %96 = arith.mulf %94, %95 : vector<4x324xf32>
    %97 = arith.addf %91, %96 : vector<4x324xf32>
    %98 = vector.extract_strided_slice %79 {offsets = [3, 0], sizes = [1, 324], strides = [1, 1]} : vector<4x324xf32> to vector<1x324xf32>
    %c0_25 = arith.constant 0 : index
    %c30 = arith.constant 30 : index
    %99 = vector.load %arg3[%c0_25, %c30] : memref<4x36xf32, #tpu.memory_space<vmem>>, vector<4x1xf32>
    %100 = vector.broadcast %98 : vector<1x324xf32> to vector<4x324xf32>
    %101 = vector.broadcast %99 : vector<4x1xf32> to vector<4x324xf32>
    %102 = arith.mulf %100, %101 : vector<4x324xf32>
    %103 = arith.addf %97, %102 : vector<4x324xf32>
    %c0_26 = arith.constant 0 : index
    %c0_27 = arith.constant 0 : index
    %c128 = arith.constant 128 : index
    %104 = vector.load %arg1[%c0_26, %c0_27, %c128] : memref<1x4x512xf32, #tpu.memory_space<vmem>>, vector<1x4x324xf32>
    %105 = vector.shape_cast %104 : vector<1x4x324xf32> to vector<4x324xf32>
    %106 = vector.extract_strided_slice %105 {offsets = [0, 0], sizes = [1, 324], strides = [1, 1]} : vector<4x324xf32> to vector<1x324xf32>
    %c0_28 = arith.constant 0 : index
    %c4 = arith.constant 4 : index
    %107 = vector.load %arg3[%c0_28, %c4] : memref<4x36xf32, #tpu.memory_space<vmem>>, vector<4x1xf32>
    %108 = vector.broadcast %106 : vector<1x324xf32> to vector<4x324xf32>
    %109 = vector.broadcast %107 : vector<4x1xf32> to vector<4x324xf32>
    %110 = arith.mulf %108, %109 : vector<4x324xf32>
    %111 = arith.addf %103, %110 : vector<4x324xf32>
    %112 = vector.extract_strided_slice %105 {offsets = [1, 0], sizes = [1, 324], strides = [1, 1]} : vector<4x324xf32> to vector<1x324xf32>
    %c0_29 = arith.constant 0 : index
    %c13 = arith.constant 13 : index
    %113 = vector.load %arg3[%c0_29, %c13] : memref<4x36xf32, #tpu.memory_space<vmem>>, vector<4x1xf32>
    %114 = vector.broadcast %112 : vector<1x324xf32> to vector<4x324xf32>
    %115 = vector.broadcast %113 : vector<4x1xf32> to vector<4x324xf32>
    %116 = arith.mulf %114, %115 : vector<4x324xf32>
    %117 = arith.addf %111, %116 : vector<4x324xf32>
    %118 = vector.extract_strided_slice %105 {offsets = [2, 0], sizes = [1, 324], strides = [1, 1]} : vector<4x324xf32> to vector<1x324xf32>
    %c0_30 = arith.constant 0 : index
    %c22 = arith.constant 22 : index
    %119 = vector.load %arg3[%c0_30, %c22] : memref<4x36xf32, #tpu.memory_space<vmem>>, vector<4x1xf32>
    %120 = vector.broadcast %118 : vector<1x324xf32> to vector<4x324xf32>
    %121 = vector.broadcast %119 : vector<4x1xf32> to vector<4x324xf32>
    %122 = arith.mulf %120, %121 : vector<4x324xf32>
    %123 = arith.addf %117, %122 : vector<4x324xf32>
    %124 = vector.extract_strided_slice %105 {offsets = [3, 0], sizes = [1, 324], strides = [1, 1]} : vector<4x324xf32> to vector<1x324xf32>
    %c0_31 = arith.constant 0 : index
    %c31 = arith.constant 31 : index
    %125 = vector.load %arg3[%c0_31, %c31] : memref<4x36xf32, #tpu.memory_space<vmem>>, vector<4x1xf32>
    %126 = vector.broadcast %124 : vector<1x324xf32> to vector<4x324xf32>
    %127 = vector.broadcast %125 : vector<4x1xf32> to vector<4x324xf32>
    %128 = arith.mulf %126, %127 : vector<4x324xf32>
    %129 = arith.addf %123, %128 : vector<4x324xf32>
    %c0_32 = arith.constant 0 : index
    %c0_33 = arith.constant 0 : index
    %c129 = arith.constant 129 : index
    %130 = vector.load %arg1[%c0_32, %c0_33, %c129] : memref<1x4x512xf32, #tpu.memory_space<vmem>>, vector<1x4x324xf32>
    %131 = vector.shape_cast %130 : vector<1x4x324xf32> to vector<4x324xf32>
    %132 = vector.extract_strided_slice %131 {offsets = [0, 0], sizes = [1, 324], strides = [1, 1]} : vector<4x324xf32> to vector<1x324xf32>
    %c0_34 = arith.constant 0 : index
    %c5 = arith.constant 5 : index
    %133 = vector.load %arg3[%c0_34, %c5] : memref<4x36xf32, #tpu.memory_space<vmem>>, vector<4x1xf32>
    %134 = vector.broadcast %132 : vector<1x324xf32> to vector<4x324xf32>
    %135 = vector.broadcast %133 : vector<4x1xf32> to vector<4x324xf32>
    %136 = arith.mulf %134, %135 : vector<4x324xf32>
    %137 = arith.addf %129, %136 : vector<4x324xf32>
    %138 = vector.extract_strided_slice %131 {offsets = [1, 0], sizes = [1, 324], strides = [1, 1]} : vector<4x324xf32> to vector<1x324xf32>
    %c0_35 = arith.constant 0 : index
    %c14 = arith.constant 14 : index
    %139 = vector.load %arg3[%c0_35, %c14] : memref<4x36xf32, #tpu.memory_space<vmem>>, vector<4x1xf32>
    %140 = vector.broadcast %138 : vector<1x324xf32> to vector<4x324xf32>
    %141 = vector.broadcast %139 : vector<4x1xf32> to vector<4x324xf32>
    %142 = arith.mulf %140, %141 : vector<4x324xf32>
    %143 = arith.addf %137, %142 : vector<4x324xf32>
    %144 = vector.extract_strided_slice %131 {offsets = [2, 0], sizes = [1, 324], strides = [1, 1]} : vector<4x324xf32> to vector<1x324xf32>
    %c0_36 = arith.constant 0 : index
    %c23 = arith.constant 23 : index
    %145 = vector.load %arg3[%c0_36, %c23] : memref<4x36xf32, #tpu.memory_space<vmem>>, vector<4x1xf32>
    %146 = vector.broadcast %144 : vector<1x324xf32> to vector<4x324xf32>
    %147 = vector.broadcast %145 : vector<4x1xf32> to vector<4x324xf32>
    %148 = arith.mulf %146, %147 : vector<4x324xf32>
    %149 = arith.addf %143, %148 : vector<4x324xf32>
    %150 = vector.extract_strided_slice %131 {offsets = [3, 0], sizes = [1, 324], strides = [1, 1]} : vector<4x324xf32> to vector<1x324xf32>
    %c0_37 = arith.constant 0 : index
    %c32 = arith.constant 32 : index
    %151 = vector.load %arg3[%c0_37, %c32] : memref<4x36xf32, #tpu.memory_space<vmem>>, vector<4x1xf32>
    %152 = vector.broadcast %150 : vector<1x324xf32> to vector<4x324xf32>
    %153 = vector.broadcast %151 : vector<4x1xf32> to vector<4x324xf32>
    %154 = arith.mulf %152, %153 : vector<4x324xf32>
    %155 = arith.addf %149, %154 : vector<4x324xf32>
    %c0_38 = arith.constant 0 : index
    %c0_39 = arith.constant 0 : index
    %c145 = arith.constant 145 : index
    %156 = vector.load %arg1[%c0_38, %c0_39, %c145] : memref<1x4x512xf32, #tpu.memory_space<vmem>>, vector<1x4x324xf32>
    %157 = vector.shape_cast %156 : vector<1x4x324xf32> to vector<4x324xf32>
    %158 = vector.extract_strided_slice %157 {offsets = [0, 0], sizes = [1, 324], strides = [1, 1]} : vector<4x324xf32> to vector<1x324xf32>
    %c0_40 = arith.constant 0 : index
    %c6 = arith.constant 6 : index
    %159 = vector.load %arg3[%c0_40, %c6] : memref<4x36xf32, #tpu.memory_space<vmem>>, vector<4x1xf32>
    %160 = vector.broadcast %158 : vector<1x324xf32> to vector<4x324xf32>
    %161 = vector.broadcast %159 : vector<4x1xf32> to vector<4x324xf32>
    %162 = arith.mulf %160, %161 : vector<4x324xf32>
    %163 = arith.addf %155, %162 : vector<4x324xf32>
    %164 = vector.extract_strided_slice %157 {offsets = [1, 0], sizes = [1, 324], strides = [1, 1]} : vector<4x324xf32> to vector<1x324xf32>
    %c0_41 = arith.constant 0 : index
    %c15 = arith.constant 15 : index
    %165 = vector.load %arg3[%c0_41, %c15] : memref<4x36xf32, #tpu.memory_space<vmem>>, vector<4x1xf32>
    %166 = vector.broadcast %164 : vector<1x324xf32> to vector<4x324xf32>
    %167 = vector.broadcast %165 : vector<4x1xf32> to vector<4x324xf32>
    %168 = arith.mulf %166, %167 : vector<4x324xf32>
    %169 = arith.addf %163, %168 : vector<4x324xf32>
    %170 = vector.extract_strided_slice %157 {offsets = [2, 0], sizes = [1, 324], strides = [1, 1]} : vector<4x324xf32> to vector<1x324xf32>
    %c0_42 = arith.constant 0 : index
    %c24 = arith.constant 24 : index
    %171 = vector.load %arg3[%c0_42, %c24] : memref<4x36xf32, #tpu.memory_space<vmem>>, vector<4x1xf32>
    %172 = vector.broadcast %170 : vector<1x324xf32> to vector<4x324xf32>
    %173 = vector.broadcast %171 : vector<4x1xf32> to vector<4x324xf32>
    %174 = arith.mulf %172, %173 : vector<4x324xf32>
    %175 = arith.addf %169, %174 : vector<4x324xf32>
    %176 = vector.extract_strided_slice %157 {offsets = [3, 0], sizes = [1, 324], strides = [1, 1]} : vector<4x324xf32> to vector<1x324xf32>
    %c0_43 = arith.constant 0 : index
    %c33 = arith.constant 33 : index
    %177 = vector.load %arg3[%c0_43, %c33] : memref<4x36xf32, #tpu.memory_space<vmem>>, vector<4x1xf32>
    %178 = vector.broadcast %176 : vector<1x324xf32> to vector<4x324xf32>
    %179 = vector.broadcast %177 : vector<4x1xf32> to vector<4x324xf32>
    %180 = arith.mulf %178, %179 : vector<4x324xf32>
    %181 = arith.addf %175, %180 : vector<4x324xf32>
    %c0_44 = arith.constant 0 : index
    %c0_45 = arith.constant 0 : index
    %c146 = arith.constant 146 : index
    %182 = vector.load %arg1[%c0_44, %c0_45, %c146] : memref<1x4x512xf32, #tpu.memory_space<vmem>>, vector<1x4x324xf32>
    %183 = vector.shape_cast %182 : vector<1x4x324xf32> to vector<4x324xf32>
    %184 = vector.extract_strided_slice %183 {offsets = [0, 0], sizes = [1, 324], strides = [1, 1]} : vector<4x324xf32> to vector<1x324xf32>
    %c0_46 = arith.constant 0 : index
    %c7 = arith.constant 7 : index
    %185 = vector.load %arg3[%c0_46, %c7] : memref<4x36xf32, #tpu.memory_space<vmem>>, vector<4x1xf32>
    %186 = vector.broadcast %184 : vector<1x324xf32> to vector<4x324xf32>
    %187 = vector.broadcast %185 : vector<4x1xf32> to vector<4x324xf32>
    %188 = arith.mulf %186, %187 : vector<4x324xf32>
    %189 = arith.addf %181, %188 : vector<4x324xf32>
    %190 = vector.extract_strided_slice %183 {offsets = [1, 0], sizes = [1, 324], strides = [1, 1]} : vector<4x324xf32> to vector<1x324xf32>
    %c0_47 = arith.constant 0 : index
    %c16 = arith.constant 16 : index
    %191 = vector.load %arg3[%c0_47, %c16] : memref<4x36xf32, #tpu.memory_space<vmem>>, vector<4x1xf32>
    %192 = vector.broadcast %190 : vector<1x324xf32> to vector<4x324xf32>
    %193 = vector.broadcast %191 : vector<4x1xf32> to vector<4x324xf32>
    %194 = arith.mulf %192, %193 : vector<4x324xf32>
    %195 = arith.addf %189, %194 : vector<4x324xf32>
    %196 = vector.extract_strided_slice %183 {offsets = [2, 0], sizes = [1, 324], strides = [1, 1]} : vector<4x324xf32> to vector<1x324xf32>
    %c0_48 = arith.constant 0 : index
    %c25 = arith.constant 25 : index
    %197 = vector.load %arg3[%c0_48, %c25] : memref<4x36xf32, #tpu.memory_space<vmem>>, vector<4x1xf32>
    %198 = vector.broadcast %196 : vector<1x324xf32> to vector<4x324xf32>
    %199 = vector.broadcast %197 : vector<4x1xf32> to vector<4x324xf32>
    %200 = arith.mulf %198, %199 : vector<4x324xf32>
    %201 = arith.addf %195, %200 : vector<4x324xf32>
    %202 = vector.extract_strided_slice %183 {offsets = [3, 0], sizes = [1, 324], strides = [1, 1]} : vector<4x324xf32> to vector<1x324xf32>
    %c0_49 = arith.constant 0 : index
    %c34 = arith.constant 34 : index
    %203 = vector.load %arg3[%c0_49, %c34] : memref<4x36xf32, #tpu.memory_space<vmem>>, vector<4x1xf32>
    %204 = vector.broadcast %202 : vector<1x324xf32> to vector<4x324xf32>
    %205 = vector.broadcast %203 : vector<4x1xf32> to vector<4x324xf32>
    %206 = arith.mulf %204, %205 : vector<4x324xf32>
    %207 = arith.addf %201, %206 : vector<4x324xf32>
    %c0_50 = arith.constant 0 : index
    %c0_51 = arith.constant 0 : index
    %c147 = arith.constant 147 : index
    %208 = vector.load %arg1[%c0_50, %c0_51, %c147] : memref<1x4x512xf32, #tpu.memory_space<vmem>>, vector<1x4x324xf32>
    %209 = vector.shape_cast %208 : vector<1x4x324xf32> to vector<4x324xf32>
    %210 = vector.extract_strided_slice %209 {offsets = [0, 0], sizes = [1, 324], strides = [1, 1]} : vector<4x324xf32> to vector<1x324xf32>
    %c0_52 = arith.constant 0 : index
    %c8 = arith.constant 8 : index
    %211 = vector.load %arg3[%c0_52, %c8] : memref<4x36xf32, #tpu.memory_space<vmem>>, vector<4x1xf32>
    %212 = vector.broadcast %210 : vector<1x324xf32> to vector<4x324xf32>
    %213 = vector.broadcast %211 : vector<4x1xf32> to vector<4x324xf32>
    %214 = arith.mulf %212, %213 : vector<4x324xf32>
    %215 = arith.addf %207, %214 : vector<4x324xf32>
    %216 = vector.extract_strided_slice %209 {offsets = [1, 0], sizes = [1, 324], strides = [1, 1]} : vector<4x324xf32> to vector<1x324xf32>
    %c0_53 = arith.constant 0 : index
    %c17 = arith.constant 17 : index
    %217 = vector.load %arg3[%c0_53, %c17] : memref<4x36xf32, #tpu.memory_space<vmem>>, vector<4x1xf32>
    %218 = vector.broadcast %216 : vector<1x324xf32> to vector<4x324xf32>
    %219 = vector.broadcast %217 : vector<4x1xf32> to vector<4x324xf32>
    %220 = arith.mulf %218, %219 : vector<4x324xf32>
    %221 = arith.addf %215, %220 : vector<4x324xf32>
    %222 = vector.extract_strided_slice %209 {offsets = [2, 0], sizes = [1, 324], strides = [1, 1]} : vector<4x324xf32> to vector<1x324xf32>
    %c0_54 = arith.constant 0 : index
    %c26 = arith.constant 26 : index
    %223 = vector.load %arg3[%c0_54, %c26] : memref<4x36xf32, #tpu.memory_space<vmem>>, vector<4x1xf32>
    %224 = vector.broadcast %222 : vector<1x324xf32> to vector<4x324xf32>
    %225 = vector.broadcast %223 : vector<4x1xf32> to vector<4x324xf32>
    %226 = arith.mulf %224, %225 : vector<4x324xf32>
    %227 = arith.addf %221, %226 : vector<4x324xf32>
    %228 = vector.extract_strided_slice %209 {offsets = [3, 0], sizes = [1, 324], strides = [1, 1]} : vector<4x324xf32> to vector<1x324xf32>
    %c0_55 = arith.constant 0 : index
    %c35 = arith.constant 35 : index
    %229 = vector.load %arg3[%c0_55, %c35] : memref<4x36xf32, #tpu.memory_space<vmem>>, vector<4x1xf32>
    %230 = vector.broadcast %228 : vector<1x324xf32> to vector<4x324xf32>
    %231 = vector.broadcast %229 : vector<4x1xf32> to vector<4x324xf32>
    %232 = arith.mulf %230, %231 : vector<4x324xf32>
    %233 = arith.addf %227, %232 : vector<4x324xf32>
    %c0_56 = arith.constant 0 : index
    %c0_57 = arith.constant 0 : index
    %234 = vector.load %arg4[%c0_56, %c0_57] : memref<4x1xf32, #tpu.memory_space<vmem>>, vector<4x1xf32>
    %235 = vector.broadcast %234 : vector<4x1xf32> to vector<4x324xf32>
    %236 = arith.addf %233, %235 : vector<4x324xf32>
    %cst = arith.constant 0.000000e+00 : f32
    %237 = vector.broadcast %cst : f32 to vector<4x324xf32>
    %238 = arith.maximumf %236, %237 : vector<4x324xf32>
    %239 = vector.broadcast %0 : vector<1x324xf32> to vector<4x324xf32>
    %240 = arith.mulf %238, %239 : vector<4x324xf32>
    %cst_58 = arith.constant 0.000000e+00 : f32
    %241 = vector.broadcast %cst_58 : f32 to vector<4x128xf32>
    %c0_59 = arith.constant 0 : index
    %c0_60 = arith.constant 0 : index
    %242 = vector.load %arg8[%c0_59, %c0_60] : memref<4x512xf32, #tpu.memory_space<vmem>>, vector<4x128xf32>
    tpu.vector_store %arg8[%c0_59, %c0_60], %241 {strides = array<i32>} : memref<4x512xf32, #tpu.memory_space<vmem>>, vector<4x128xf32>,
    %cst_61 = arith.constant 0.000000e+00 : f32
    %243 = vector.broadcast %cst_61 : f32 to vector<4x60xf32>
    %c0_62 = arith.constant 0 : index
    %c452 = arith.constant 452 : index
    %244 = vector.load %arg8[%c0_62, %c452] : memref<4x512xf32, #tpu.memory_space<vmem>>, vector<4x60xf32>
    tpu.vector_store %arg8[%c0_62, %c452], %243 {strides = array<i32>} : memref<4x512xf32, #tpu.memory_space<vmem>>, vector<4x60xf32>,
    %c0_63 = arith.constant 0 : index
    %c128_64 = arith.constant 128 : index
    %245 = vector.load %arg8[%c0_63, %c128_64] : memref<4x512xf32, #tpu.memory_space<vmem>>, vector<4x324xf32>
    tpu.vector_store %arg8[%c0_63, %c128_64], %240 {strides = array<i32>} : memref<4x512xf32, #tpu.memory_space<vmem>>, vector<4x324xf32>,
    %c0_65 = arith.constant 0 : index
    %c0_66 = arith.constant 0 : index
    %c128_67 = arith.constant 128 : index
    %246 = vector.load %arg1[%c0_65, %c0_66, %c128_67] : memref<1x4x512xf32, #tpu.memory_space<vmem>>, vector<1x4x324xf32>
    %247 = vector.shape_cast %246 : vector<1x4x324xf32> to vector<4x324xf32>
    %c0_68 = arith.constant 0 : index
    %c109_69 = arith.constant 109 : index
    %248 = vector.load %arg8[%c0_68, %c109_69] : memref<4x512xf32, #tpu.memory_space<vmem>>, vector<4x324xf32>
    %249 = vector.extract_strided_slice %248 {offsets = [0, 0], sizes = [1, 324], strides = [1, 1]} : vector<4x324xf32> to vector<1x324xf32>
    %c0_70 = arith.constant 0 : index
    %c0_71 = arith.constant 0 : index
    %250 = vector.load %arg5[%c0_70, %c0_71] : memref<4x36xf32, #tpu.memory_space<vmem>>, vector<4x1xf32>
    %251 = vector.broadcast %249 : vector<1x324xf32> to vector<4x324xf32>
    %252 = vector.broadcast %250 : vector<4x1xf32> to vector<4x324xf32>
    %253 = arith.mulf %251, %252 : vector<4x324xf32>
    %254 = vector.extract_strided_slice %248 {offsets = [1, 0], sizes = [1, 324], strides = [1, 1]} : vector<4x324xf32> to vector<1x324xf32>
    %c0_72 = arith.constant 0 : index
    %c9_73 = arith.constant 9 : index
    %255 = vector.load %arg5[%c0_72, %c9_73] : memref<4x36xf32, #tpu.memory_space<vmem>>, vector<4x1xf32>
    %256 = vector.broadcast %254 : vector<1x324xf32> to vector<4x324xf32>
    %257 = vector.broadcast %255 : vector<4x1xf32> to vector<4x324xf32>
    %258 = arith.mulf %256, %257 : vector<4x324xf32>
    %259 = arith.addf %253, %258 : vector<4x324xf32>
    %260 = vector.extract_strided_slice %248 {offsets = [2, 0], sizes = [1, 324], strides = [1, 1]} : vector<4x324xf32> to vector<1x324xf32>
    %c0_74 = arith.constant 0 : index
    %c18_75 = arith.constant 18 : index
    %261 = vector.load %arg5[%c0_74, %c18_75] : memref<4x36xf32, #tpu.memory_space<vmem>>, vector<4x1xf32>
    %262 = vector.broadcast %260 : vector<1x324xf32> to vector<4x324xf32>
    %263 = vector.broadcast %261 : vector<4x1xf32> to vector<4x324xf32>
    %264 = arith.mulf %262, %263 : vector<4x324xf32>
    %265 = arith.addf %259, %264 : vector<4x324xf32>
    %266 = vector.extract_strided_slice %248 {offsets = [3, 0], sizes = [1, 324], strides = [1, 1]} : vector<4x324xf32> to vector<1x324xf32>
    %c0_76 = arith.constant 0 : index
    %c27_77 = arith.constant 27 : index
    %267 = vector.load %arg5[%c0_76, %c27_77] : memref<4x36xf32, #tpu.memory_space<vmem>>, vector<4x1xf32>
    %268 = vector.broadcast %266 : vector<1x324xf32> to vector<4x324xf32>
    %269 = vector.broadcast %267 : vector<4x1xf32> to vector<4x324xf32>
    %270 = arith.mulf %268, %269 : vector<4x324xf32>
    %271 = arith.addf %265, %270 : vector<4x324xf32>
    %c0_78 = arith.constant 0 : index
    %c110_79 = arith.constant 110 : index
    %272 = vector.load %arg8[%c0_78, %c110_79] : memref<4x512xf32, #tpu.memory_space<vmem>>, vector<4x324xf32>
    %273 = vector.extract_strided_slice %272 {offsets = [0, 0], sizes = [1, 324], strides = [1, 1]} : vector<4x324xf32> to vector<1x324xf32>
    %c0_80 = arith.constant 0 : index
    %c1_81 = arith.constant 1 : index
    %274 = vector.load %arg5[%c0_80, %c1_81] : memref<4x36xf32, #tpu.memory_space<vmem>>, vector<4x1xf32>
    %275 = vector.broadcast %273 : vector<1x324xf32> to vector<4x324xf32>
    %276 = vector.broadcast %274 : vector<4x1xf32> to vector<4x324xf32>
    %277 = arith.mulf %275, %276 : vector<4x324xf32>
    %278 = arith.addf %271, %277 : vector<4x324xf32>
    %279 = vector.extract_strided_slice %272 {offsets = [1, 0], sizes = [1, 324], strides = [1, 1]} : vector<4x324xf32> to vector<1x324xf32>
    %c0_82 = arith.constant 0 : index
    %c10_83 = arith.constant 10 : index
    %280 = vector.load %arg5[%c0_82, %c10_83] : memref<4x36xf32, #tpu.memory_space<vmem>>, vector<4x1xf32>
    %281 = vector.broadcast %279 : vector<1x324xf32> to vector<4x324xf32>
    %282 = vector.broadcast %280 : vector<4x1xf32> to vector<4x324xf32>
    %283 = arith.mulf %281, %282 : vector<4x324xf32>
    %284 = arith.addf %278, %283 : vector<4x324xf32>
    %285 = vector.extract_strided_slice %272 {offsets = [2, 0], sizes = [1, 324], strides = [1, 1]} : vector<4x324xf32> to vector<1x324xf32>
    %c0_84 = arith.constant 0 : index
    %c19_85 = arith.constant 19 : index
    %286 = vector.load %arg5[%c0_84, %c19_85] : memref<4x36xf32, #tpu.memory_space<vmem>>, vector<4x1xf32>
    %287 = vector.broadcast %285 : vector<1x324xf32> to vector<4x324xf32>
    %288 = vector.broadcast %286 : vector<4x1xf32> to vector<4x324xf32>
    %289 = arith.mulf %287, %288 : vector<4x324xf32>
    %290 = arith.addf %284, %289 : vector<4x324xf32>
    %291 = vector.extract_strided_slice %272 {offsets = [3, 0], sizes = [1, 324], strides = [1, 1]} : vector<4x324xf32> to vector<1x324xf32>
    %c0_86 = arith.constant 0 : index
    %c28_87 = arith.constant 28 : index
    %292 = vector.load %arg5[%c0_86, %c28_87] : memref<4x36xf32, #tpu.memory_space<vmem>>, vector<4x1xf32>
    %293 = vector.broadcast %291 : vector<1x324xf32> to vector<4x324xf32>
    %294 = vector.broadcast %292 : vector<4x1xf32> to vector<4x324xf32>
    %295 = arith.mulf %293, %294 : vector<4x324xf32>
    %296 = arith.addf %290, %295 : vector<4x324xf32>
    %c0_88 = arith.constant 0 : index
    %c111_89 = arith.constant 111 : index
    %297 = vector.load %arg8[%c0_88, %c111_89] : memref<4x512xf32, #tpu.memory_space<vmem>>, vector<4x324xf32>
    %298 = vector.extract_strided_slice %297 {offsets = [0, 0], sizes = [1, 324], strides = [1, 1]} : vector<4x324xf32> to vector<1x324xf32>
    %c0_90 = arith.constant 0 : index
    %c2_91 = arith.constant 2 : index
    %299 = vector.load %arg5[%c0_90, %c2_91] : memref<4x36xf32, #tpu.memory_space<vmem>>, vector<4x1xf32>
    %300 = vector.broadcast %298 : vector<1x324xf32> to vector<4x324xf32>
    %301 = vector.broadcast %299 : vector<4x1xf32> to vector<4x324xf32>
    %302 = arith.mulf %300, %301 : vector<4x324xf32>
    %303 = arith.addf %296, %302 : vector<4x324xf32>
    %304 = vector.extract_strided_slice %297 {offsets = [1, 0], sizes = [1, 324], strides = [1, 1]} : vector<4x324xf32> to vector<1x324xf32>
    %c0_92 = arith.constant 0 : index
    %c11_93 = arith.constant 11 : index
    %305 = vector.load %arg5[%c0_92, %c11_93] : memref<4x36xf32, #tpu.memory_space<vmem>>, vector<4x1xf32>
    %306 = vector.broadcast %304 : vector<1x324xf32> to vector<4x324xf32>
    %307 = vector.broadcast %305 : vector<4x1xf32> to vector<4x324xf32>
    %308 = arith.mulf %306, %307 : vector<4x324xf32>
    %309 = arith.addf %303, %308 : vector<4x324xf32>
    %310 = vector.extract_strided_slice %297 {offsets = [2, 0], sizes = [1, 324], strides = [1, 1]} : vector<4x324xf32> to vector<1x324xf32>
    %c0_94 = arith.constant 0 : index
    %c20_95 = arith.constant 20 : index
    %311 = vector.load %arg5[%c0_94, %c20_95] : memref<4x36xf32, #tpu.memory_space<vmem>>, vector<4x1xf32>
    %312 = vector.broadcast %310 : vector<1x324xf32> to vector<4x324xf32>
    %313 = vector.broadcast %311 : vector<4x1xf32> to vector<4x324xf32>
    %314 = arith.mulf %312, %313 : vector<4x324xf32>
    %315 = arith.addf %309, %314 : vector<4x324xf32>
    %316 = vector.extract_strided_slice %297 {offsets = [3, 0], sizes = [1, 324], strides = [1, 1]} : vector<4x324xf32> to vector<1x324xf32>
    %c0_96 = arith.constant 0 : index
    %c29_97 = arith.constant 29 : index
    %317 = vector.load %arg5[%c0_96, %c29_97] : memref<4x36xf32, #tpu.memory_space<vmem>>, vector<4x1xf32>
    %318 = vector.broadcast %316 : vector<1x324xf32> to vector<4x324xf32>
    %319 = vector.broadcast %317 : vector<4x1xf32> to vector<4x324xf32>
    %320 = arith.mulf %318, %319 : vector<4x324xf32>
    %321 = arith.addf %315, %320 : vector<4x324xf32>
    %c0_98 = arith.constant 0 : index
    %c127_99 = arith.constant 127 : index
    %322 = vector.load %arg8[%c0_98, %c127_99] : memref<4x512xf32, #tpu.memory_space<vmem>>, vector<4x324xf32>
    %323 = vector.extract_strided_slice %322 {offsets = [0, 0], sizes = [1, 324], strides = [1, 1]} : vector<4x324xf32> to vector<1x324xf32>
    %c0_100 = arith.constant 0 : index
    %c3_101 = arith.constant 3 : index
    %324 = vector.load %arg5[%c0_100, %c3_101] : memref<4x36xf32, #tpu.memory_space<vmem>>, vector<4x1xf32>
    %325 = vector.broadcast %323 : vector<1x324xf32> to vector<4x324xf32>
    %326 = vector.broadcast %324 : vector<4x1xf32> to vector<4x324xf32>
    %327 = arith.mulf %325, %326 : vector<4x324xf32>
    %328 = arith.addf %321, %327 : vector<4x324xf32>
    %329 = vector.extract_strided_slice %322 {offsets = [1, 0], sizes = [1, 324], strides = [1, 1]} : vector<4x324xf32> to vector<1x324xf32>
    %c0_102 = arith.constant 0 : index
    %c12_103 = arith.constant 12 : index
    %330 = vector.load %arg5[%c0_102, %c12_103] : memref<4x36xf32, #tpu.memory_space<vmem>>, vector<4x1xf32>
    %331 = vector.broadcast %329 : vector<1x324xf32> to vector<4x324xf32>
    %332 = vector.broadcast %330 : vector<4x1xf32> to vector<4x324xf32>
    %333 = arith.mulf %331, %332 : vector<4x324xf32>
    %334 = arith.addf %328, %333 : vector<4x324xf32>
    %335 = vector.extract_strided_slice %322 {offsets = [2, 0], sizes = [1, 324], strides = [1, 1]} : vector<4x324xf32> to vector<1x324xf32>
    %c0_104 = arith.constant 0 : index
    %c21_105 = arith.constant 21 : index
    %336 = vector.load %arg5[%c0_104, %c21_105] : memref<4x36xf32, #tpu.memory_space<vmem>>, vector<4x1xf32>
    %337 = vector.broadcast %335 : vector<1x324xf32> to vector<4x324xf32>
    %338 = vector.broadcast %336 : vector<4x1xf32> to vector<4x324xf32>
    %339 = arith.mulf %337, %338 : vector<4x324xf32>
    %340 = arith.addf %334, %339 : vector<4x324xf32>
    %341 = vector.extract_strided_slice %322 {offsets = [3, 0], sizes = [1, 324], strides = [1, 1]} : vector<4x324xf32> to vector<1x324xf32>
    %c0_106 = arith.constant 0 : index
    %c30_107 = arith.constant 30 : index
    %342 = vector.load %arg5[%c0_106, %c30_107] : memref<4x36xf32, #tpu.memory_space<vmem>>, vector<4x1xf32>
    %343 = vector.broadcast %341 : vector<1x324xf32> to vector<4x324xf32>
    %344 = vector.broadcast %342 : vector<4x1xf32> to vector<4x324xf32>
    %345 = arith.mulf %343, %344 : vector<4x324xf32>
    %346 = arith.addf %340, %345 : vector<4x324xf32>
    %c0_108 = arith.constant 0 : index
    %c128_109 = arith.constant 128 : index
    %347 = vector.load %arg8[%c0_108, %c128_109] : memref<4x512xf32, #tpu.memory_space<vmem>>, vector<4x324xf32>
    %348 = vector.extract_strided_slice %347 {offsets = [0, 0], sizes = [1, 324], strides = [1, 1]} : vector<4x324xf32> to vector<1x324xf32>
    %c0_110 = arith.constant 0 : index
    %c4_111 = arith.constant 4 : index
    %349 = vector.load %arg5[%c0_110, %c4_111] : memref<4x36xf32, #tpu.memory_space<vmem>>, vector<4x1xf32>
    %350 = vector.broadcast %348 : vector<1x324xf32> to vector<4x324xf32>
    %351 = vector.broadcast %349 : vector<4x1xf32> to vector<4x324xf32>
    %352 = arith.mulf %350, %351 : vector<4x324xf32>
    %353 = arith.addf %346, %352 : vector<4x324xf32>
    %354 = vector.extract_strided_slice %347 {offsets = [1, 0], sizes = [1, 324], strides = [1, 1]} : vector<4x324xf32> to vector<1x324xf32>
    %c0_112 = arith.constant 0 : index
    %c13_113 = arith.constant 13 : index
    %355 = vector.load %arg5[%c0_112, %c13_113] : memref<4x36xf32, #tpu.memory_space<vmem>>, vector<4x1xf32>
    %356 = vector.broadcast %354 : vector<1x324xf32> to vector<4x324xf32>
    %357 = vector.broadcast %355 : vector<4x1xf32> to vector<4x324xf32>
    %358 = arith.mulf %356, %357 : vector<4x324xf32>
    %359 = arith.addf %353, %358 : vector<4x324xf32>
    %360 = vector.extract_strided_slice %347 {offsets = [2, 0], sizes = [1, 324], strides = [1, 1]} : vector<4x324xf32> to vector<1x324xf32>
    %c0_114 = arith.constant 0 : index
    %c22_115 = arith.constant 22 : index
    %361 = vector.load %arg5[%c0_114, %c22_115] : memref<4x36xf32, #tpu.memory_space<vmem>>, vector<4x1xf32>
    %362 = vector.broadcast %360 : vector<1x324xf32> to vector<4x324xf32>
    %363 = vector.broadcast %361 : vector<4x1xf32> to vector<4x324xf32>
    %364 = arith.mulf %362, %363 : vector<4x324xf32>
    %365 = arith.addf %359, %364 : vector<4x324xf32>
    %366 = vector.extract_strided_slice %347 {offsets = [3, 0], sizes = [1, 324], strides = [1, 1]} : vector<4x324xf32> to vector<1x324xf32>
    %c0_116 = arith.constant 0 : index
    %c31_117 = arith.constant 31 : index
    %367 = vector.load %arg5[%c0_116, %c31_117] : memref<4x36xf32, #tpu.memory_space<vmem>>, vector<4x1xf32>
    %368 = vector.broadcast %366 : vector<1x324xf32> to vector<4x324xf32>
    %369 = vector.broadcast %367 : vector<4x1xf32> to vector<4x324xf32>
    %370 = arith.mulf %368, %369 : vector<4x324xf32>
    %371 = arith.addf %365, %370 : vector<4x324xf32>
    %c0_118 = arith.constant 0 : index
    %c129_119 = arith.constant 129 : index
    %372 = vector.load %arg8[%c0_118, %c129_119] : memref<4x512xf32, #tpu.memory_space<vmem>>, vector<4x324xf32>
    %373 = vector.extract_strided_slice %372 {offsets = [0, 0], sizes = [1, 324], strides = [1, 1]} : vector<4x324xf32> to vector<1x324xf32>
    %c0_120 = arith.constant 0 : index
    %c5_121 = arith.constant 5 : index
    %374 = vector.load %arg5[%c0_120, %c5_121] : memref<4x36xf32, #tpu.memory_space<vmem>>, vector<4x1xf32>
    %375 = vector.broadcast %373 : vector<1x324xf32> to vector<4x324xf32>
    %376 = vector.broadcast %374 : vector<4x1xf32> to vector<4x324xf32>
    %377 = arith.mulf %375, %376 : vector<4x324xf32>
    %378 = arith.addf %371, %377 : vector<4x324xf32>
    %379 = vector.extract_strided_slice %372 {offsets = [1, 0], sizes = [1, 324], strides = [1, 1]} : vector<4x324xf32> to vector<1x324xf32>
    %c0_122 = arith.constant 0 : index
    %c14_123 = arith.constant 14 : index
    %380 = vector.load %arg5[%c0_122, %c14_123] : memref<4x36xf32, #tpu.memory_space<vmem>>, vector<4x1xf32>
    %381 = vector.broadcast %379 : vector<1x324xf32> to vector<4x324xf32>
    %382 = vector.broadcast %380 : vector<4x1xf32> to vector<4x324xf32>
    %383 = arith.mulf %381, %382 : vector<4x324xf32>
    %384 = arith.addf %378, %383 : vector<4x324xf32>
    %385 = vector.extract_strided_slice %372 {offsets = [2, 0], sizes = [1, 324], strides = [1, 1]} : vector<4x324xf32> to vector<1x324xf32>
    %c0_124 = arith.constant 0 : index
    %c23_125 = arith.constant 23 : index
    %386 = vector.load %arg5[%c0_124, %c23_125] : memref<4x36xf32, #tpu.memory_space<vmem>>, vector<4x1xf32>
    %387 = vector.broadcast %385 : vector<1x324xf32> to vector<4x324xf32>
    %388 = vector.broadcast %386 : vector<4x1xf32> to vector<4x324xf32>
    %389 = arith.mulf %387, %388 : vector<4x324xf32>
    %390 = arith.addf %384, %389 : vector<4x324xf32>
    %391 = vector.extract_strided_slice %372 {offsets = [3, 0], sizes = [1, 324], strides = [1, 1]} : vector<4x324xf32> to vector<1x324xf32>
    %c0_126 = arith.constant 0 : index
    %c32_127 = arith.constant 32 : index
    %392 = vector.load %arg5[%c0_126, %c32_127] : memref<4x36xf32, #tpu.memory_space<vmem>>, vector<4x1xf32>
    %393 = vector.broadcast %391 : vector<1x324xf32> to vector<4x324xf32>
    %394 = vector.broadcast %392 : vector<4x1xf32> to vector<4x324xf32>
    %395 = arith.mulf %393, %394 : vector<4x324xf32>
    %396 = arith.addf %390, %395 : vector<4x324xf32>
    %c0_128 = arith.constant 0 : index
    %c145_129 = arith.constant 145 : index
    %397 = vector.load %arg8[%c0_128, %c145_129] : memref<4x512xf32, #tpu.memory_space<vmem>>, vector<4x324xf32>
    %398 = vector.extract_strided_slice %397 {offsets = [0, 0], sizes = [1, 324], strides = [1, 1]} : vector<4x324xf32> to vector<1x324xf32>
    %c0_130 = arith.constant 0 : index
    %c6_131 = arith.constant 6 : index
    %399 = vector.load %arg5[%c0_130, %c6_131] : memref<4x36xf32, #tpu.memory_space<vmem>>, vector<4x1xf32>
    %400 = vector.broadcast %398 : vector<1x324xf32> to vector<4x324xf32>
    %401 = vector.broadcast %399 : vector<4x1xf32> to vector<4x324xf32>
    %402 = arith.mulf %400, %401 : vector<4x324xf32>
    %403 = arith.addf %396, %402 : vector<4x324xf32>
    %404 = vector.extract_strided_slice %397 {offsets = [1, 0], sizes = [1, 324], strides = [1, 1]} : vector<4x324xf32> to vector<1x324xf32>
    %c0_132 = arith.constant 0 : index
    %c15_133 = arith.constant 15 : index
    %405 = vector.load %arg5[%c0_132, %c15_133] : memref<4x36xf32, #tpu.memory_space<vmem>>, vector<4x1xf32>
    %406 = vector.broadcast %404 : vector<1x324xf32> to vector<4x324xf32>
    %407 = vector.broadcast %405 : vector<4x1xf32> to vector<4x324xf32>
    %408 = arith.mulf %406, %407 : vector<4x324xf32>
    %409 = arith.addf %403, %408 : vector<4x324xf32>
    %410 = vector.extract_strided_slice %397 {offsets = [2, 0], sizes = [1, 324], strides = [1, 1]} : vector<4x324xf32> to vector<1x324xf32>
    %c0_134 = arith.constant 0 : index
    %c24_135 = arith.constant 24 : index
    %411 = vector.load %arg5[%c0_134, %c24_135] : memref<4x36xf32, #tpu.memory_space<vmem>>, vector<4x1xf32>
    %412 = vector.broadcast %410 : vector<1x324xf32> to vector<4x324xf32>
    %413 = vector.broadcast %411 : vector<4x1xf32> to vector<4x324xf32>
    %414 = arith.mulf %412, %413 : vector<4x324xf32>
    %415 = arith.addf %409, %414 : vector<4x324xf32>
    %416 = vector.extract_strided_slice %397 {offsets = [3, 0], sizes = [1, 324], strides = [1, 1]} : vector<4x324xf32> to vector<1x324xf32>
    %c0_136 = arith.constant 0 : index
    %c33_137 = arith.constant 33 : index
    %417 = vector.load %arg5[%c0_136, %c33_137] : memref<4x36xf32, #tpu.memory_space<vmem>>, vector<4x1xf32>
    %418 = vector.broadcast %416 : vector<1x324xf32> to vector<4x324xf32>
    %419 = vector.broadcast %417 : vector<4x1xf32> to vector<4x324xf32>
    %420 = arith.mulf %418, %419 : vector<4x324xf32>
    %421 = arith.addf %415, %420 : vector<4x324xf32>
    %c0_138 = arith.constant 0 : index
    %c146_139 = arith.constant 146 : index
    %422 = vector.load %arg8[%c0_138, %c146_139] : memref<4x512xf32, #tpu.memory_space<vmem>>, vector<4x324xf32>
    %423 = vector.extract_strided_slice %422 {offsets = [0, 0], sizes = [1, 324], strides = [1, 1]} : vector<4x324xf32> to vector<1x324xf32>
    %c0_140 = arith.constant 0 : index
    %c7_141 = arith.constant 7 : index
    %424 = vector.load %arg5[%c0_140, %c7_141] : memref<4x36xf32, #tpu.memory_space<vmem>>, vector<4x1xf32>
    %425 = vector.broadcast %423 : vector<1x324xf32> to vector<4x324xf32>
    %426 = vector.broadcast %424 : vector<4x1xf32> to vector<4x324xf32>
    %427 = arith.mulf %425, %426 : vector<4x324xf32>
    %428 = arith.addf %421, %427 : vector<4x324xf32>
    %429 = vector.extract_strided_slice %422 {offsets = [1, 0], sizes = [1, 324], strides = [1, 1]} : vector<4x324xf32> to vector<1x324xf32>
    %c0_142 = arith.constant 0 : index
    %c16_143 = arith.constant 16 : index
    %430 = vector.load %arg5[%c0_142, %c16_143] : memref<4x36xf32, #tpu.memory_space<vmem>>, vector<4x1xf32>
    %431 = vector.broadcast %429 : vector<1x324xf32> to vector<4x324xf32>
    %432 = vector.broadcast %430 : vector<4x1xf32> to vector<4x324xf32>
    %433 = arith.mulf %431, %432 : vector<4x324xf32>
    %434 = arith.addf %428, %433 : vector<4x324xf32>
    %435 = vector.extract_strided_slice %422 {offsets = [2, 0], sizes = [1, 324], strides = [1, 1]} : vector<4x324xf32> to vector<1x324xf32>
    %c0_144 = arith.constant 0 : index
    %c25_145 = arith.constant 25 : index
    %436 = vector.load %arg5[%c0_144, %c25_145] : memref<4x36xf32, #tpu.memory_space<vmem>>, vector<4x1xf32>
    %437 = vector.broadcast %435 : vector<1x324xf32> to vector<4x324xf32>
    %438 = vector.broadcast %436 : vector<4x1xf32> to vector<4x324xf32>
    %439 = arith.mulf %437, %438 : vector<4x324xf32>
    %440 = arith.addf %434, %439 : vector<4x324xf32>
    %441 = vector.extract_strided_slice %422 {offsets = [3, 0], sizes = [1, 324], strides = [1, 1]} : vector<4x324xf32> to vector<1x324xf32>
    %c0_146 = arith.constant 0 : index
    %c34_147 = arith.constant 34 : index
    %442 = vector.load %arg5[%c0_146, %c34_147] : memref<4x36xf32, #tpu.memory_space<vmem>>, vector<4x1xf32>
    %443 = vector.broadcast %441 : vector<1x324xf32> to vector<4x324xf32>
    %444 = vector.broadcast %442 : vector<4x1xf32> to vector<4x324xf32>
    %445 = arith.mulf %443, %444 : vector<4x324xf32>
    %446 = arith.addf %440, %445 : vector<4x324xf32>
    %c0_148 = arith.constant 0 : index
    %c147_149 = arith.constant 147 : index
    %447 = vector.load %arg8[%c0_148, %c147_149] : memref<4x512xf32, #tpu.memory_space<vmem>>, vector<4x324xf32>
    %448 = vector.extract_strided_slice %447 {offsets = [0, 0], sizes = [1, 324], strides = [1, 1]} : vector<4x324xf32> to vector<1x324xf32>
    %c0_150 = arith.constant 0 : index
    %c8_151 = arith.constant 8 : index
    %449 = vector.load %arg5[%c0_150, %c8_151] : memref<4x36xf32, #tpu.memory_space<vmem>>, vector<4x1xf32>
    %450 = vector.broadcast %448 : vector<1x324xf32> to vector<4x324xf32>
    %451 = vector.broadcast %449 : vector<4x1xf32> to vector<4x324xf32>
    %452 = arith.mulf %450, %451 : vector<4x324xf32>
    %453 = arith.addf %446, %452 : vector<4x324xf32>
    %454 = vector.extract_strided_slice %447 {offsets = [1, 0], sizes = [1, 324], strides = [1, 1]} : vector<4x324xf32> to vector<1x324xf32>
    %c0_152 = arith.constant 0 : index
    %c17_153 = arith.constant 17 : index
    %455 = vector.load %arg5[%c0_152, %c17_153] : memref<4x36xf32, #tpu.memory_space<vmem>>, vector<4x1xf32>
    %456 = vector.broadcast %454 : vector<1x324xf32> to vector<4x324xf32>
    %457 = vector.broadcast %455 : vector<4x1xf32> to vector<4x324xf32>
    %458 = arith.mulf %456, %457 : vector<4x324xf32>
    %459 = arith.addf %453, %458 : vector<4x324xf32>
    %460 = vector.extract_strided_slice %447 {offsets = [2, 0], sizes = [1, 324], strides = [1, 1]} : vector<4x324xf32> to vector<1x324xf32>
    %c0_154 = arith.constant 0 : index
    %c26_155 = arith.constant 26 : index
    %461 = vector.load %arg5[%c0_154, %c26_155] : memref<4x36xf32, #tpu.memory_space<vmem>>, vector<4x1xf32>
    %462 = vector.broadcast %460 : vector<1x324xf32> to vector<4x324xf32>
    %463 = vector.broadcast %461 : vector<4x1xf32> to vector<4x324xf32>
    %464 = arith.mulf %462, %463 : vector<4x324xf32>
    %465 = arith.addf %459, %464 : vector<4x324xf32>
    %466 = vector.extract_strided_slice %447 {offsets = [3, 0], sizes = [1, 324], strides = [1, 1]} : vector<4x324xf32> to vector<1x324xf32>
    %c0_156 = arith.constant 0 : index
    %c35_157 = arith.constant 35 : index
    %467 = vector.load %arg5[%c0_156, %c35_157] : memref<4x36xf32, #tpu.memory_space<vmem>>, vector<4x1xf32>
    %468 = vector.broadcast %466 : vector<1x324xf32> to vector<4x324xf32>
    %469 = vector.broadcast %467 : vector<4x1xf32> to vector<4x324xf32>
    %470 = arith.mulf %468, %469 : vector<4x324xf32>
    %471 = arith.addf %465, %470 : vector<4x324xf32>
    %c0_158 = arith.constant 0 : index
    %c0_159 = arith.constant 0 : index
    %472 = vector.load %arg6[%c0_158, %c0_159] : memref<4x1xf32, #tpu.memory_space<vmem>>, vector<4x1xf32>
    %473 = vector.broadcast %472 : vector<4x1xf32> to vector<4x324xf32>
    %474 = arith.addf %471, %473 : vector<4x324xf32>
    %475 = arith.addf %474, %247 : vector<4x324xf32>
    %cst_160 = arith.constant 0.000000e+00 : f32
    %476 = vector.broadcast %cst_160 : f32 to vector<4x324xf32>
    %477 = arith.maximumf %475, %476 : vector<4x324xf32>
    %478 = vector.broadcast %0 : vector<1x324xf32> to vector<4x324xf32>
    %479 = arith.mulf %477, %478 : vector<4x324xf32>
    %c0_161 = arith.constant 0 : index
    %c0_162 = arith.constant 0 : index
    %c0_163 = arith.constant 0 : index
    %480 = vector.load %arg7[%c0_161, %c0_162, %c0_163] : memref<1x4x324xf32, #tpu.memory_space<vmem>>, vector<1x4x324xf32>
    %481 = vector.shape_cast %480 : vector<1x4x324xf32> to vector<4x324xf32>
    %482 = vector.shape_cast %479 : vector<4x324xf32> to vector<1x4x324xf32>
    tpu.vector_store %arg7[%c0_161, %c0_162, %c0_163], %482 {strides = array<i32>} : memref<1x4x324xf32, #tpu.memory_space<vmem>>, vector<1x4x324xf32>,
    return
  }
  func.func @transform_0(%arg0: i32) -> (i32, i32, i32) {
    %c0_i32 = arith.constant 0 : i32
    %c0_i32_0 = arith.constant 0 : i32
    %c0_i32_1 = arith.constant 0 : i32
    return %arg0, %c0_i32, %c0_i32_0 : i32, i32, i32
  }
  func.func @transform_1(%arg0: i32) -> (i32, i32) {
    %c0_i32 = arith.constant 0 : i32
    %c0_i32_0 = arith.constant 0 : i32
    %c0_i32_1 = arith.constant 0 : i32
    return %c0_i32, %c0_i32_0 : i32, i32
  }
  func.func @transform_2(%arg0: i32) -> (i32, i32) {
    %c0_i32 = arith.constant 0 : i32
    %c0_i32_0 = arith.constant 0 : i32
    %c0_i32_1 = arith.constant 0 : i32
    return %c0_i32, %c0_i32_0 : i32, i32
  }
  func.func @transform_3(%arg0: i32) -> (i32, i32) {
    %c0_i32 = arith.constant 0 : i32
    %c0_i32_0 = arith.constant 0 : i32
    %c0_i32_1 = arith.constant 0 : i32
    return %c0_i32, %c0_i32_0 : i32, i32
  }
  func.func @transform_4(%arg0: i32) -> (i32, i32) {
    %c0_i32 = arith.constant 0 : i32
    %c0_i32_0 = arith.constant 0 : i32
    %c0_i32_1 = arith.constant 0 : i32
    return %c0_i32, %c0_i32_0 : i32, i32
  }
  func.func @transform_5(%arg0: i32) -> (i32, i32) {
    %c0_i32 = arith.constant 0 : i32
    %c0_i32_0 = arith.constant 0 : i32
    %c0_i32_1 = arith.constant 0 : i32
    return %c0_i32, %c0_i32_0 : i32, i32
  }
  func.func @transform_6(%arg0: i32) -> (i32, i32, i32) {
    %c0_i32 = arith.constant 0 : i32
    %c0_i32_0 = arith.constant 0 : i32
    %c0_i32_1 = arith.constant 0 : i32
    return %arg0, %c0_i32, %c0_i32_0 : i32, i32, i32
  }
}

</mosaic_0001>

<llo_original>
// kernel: basic_block_forward.1
$region0: #{basic_block_forward.1}
  #allocation0 [shape = 'u32[]', space=smem, size = 0x4, offset = 0x4, fixed_abs, tag = 'smem constant byte address 0x4 - core index']
  #allocation1 [shape = 'u32[144,128]{1,0:T(1,128)}', space=vmem, size = 0x12000, scoped, tag = 'internal scratch']
  #allocation2 [shape = 'f32[4,512]{1,0:T(4,128)}', space=vmem, size = 0x2000, scoped, tag = 'scratch operand']
  %s0 = inlined_call_operand.vmem [shape: f32[2,4,512], index: 0, kind: input, shape index: {}]
  %s1 = inlined_call_operand.vmem [shape: f32[1,324], index: 1, kind: input, shape index: {}]
  %s2 = inlined_call_operand.vmem [shape: f32[4,36], index: 2, kind: input, shape index: {}]
  %s3 = inlined_call_operand.vmem [shape: f32[4,1], index: 3, kind: input, shape index: {}]
  %s4 = inlined_call_operand.vmem [shape: f32[4,36], index: 4, kind: input, shape index: {}]
  %s5 = inlined_call_operand.vmem [shape: f32[4,1], index: 5, kind: input, shape index: {}]
  %s6 = inlined_call_operand.vmem [shape: f32[2,4,324], index: 6, kind: output, shape index: {}]
  %s7 = sld [smem:[#allocation0]]
  $region57: #{basic_block_forward.1} parent=0
    _
  %s9 = ssub.s32 1, %s7
  %s10 = scalar_select 0, %s9, %s7
  loop: start=0, step=1, limit=4
  $region2: #{basic_block_forward.1} parent=0 // loop_pre_header
    _
  $region3: #{basic_block_forward.1} parent=0 // loop_header
    %s12 = sphi 0, %s16
    %p13 = scmp.ge.s32.totalorder %s12, 4
    %s22 = sphi 0, %s24
    %s25 = sphi 0, %s22
    %s26 = sphi 0, %s25
    %s42 = sphi 0, %s26
    %s46 = sphi 0, %s46
    %s48 = sphi 0, %s46
    %s49 = sphi 0, %s48
    %s63 = sphi 0, %s49
    %s67 = sphi 0, %s67
    %s69 = sphi 0, %s67
    %s70 = sphi 0, %s69
    %s84 = sphi 0, %s70
    %s88 = sphi 0, %s88
    %s90 = sphi 0, %s88
    %s91 = sphi 0, %s90
    %s105 = sphi 0, %s91
    %s109 = sphi 0, %s109
    %s111 = sphi 0, %s109
    %s112 = sphi 0, %s111
    %s126 = sphi 0, %s112
    %s130 = sphi 0, %s130
    %s132 = sphi 0, %s130
    %s133 = sphi 0, %s132
    %s147 = sphi 0, %s133
    %s153 = sphi 0, %s155
    %s156 = sphi 0, %s153
    %s157 = sphi 0, %s156
    %s173 = sphi 0, %s157
  $region4: #{basic_block_forward.1} parent=0 // loop_header_branch
    %15 = sbr.rel (%p13) target = $region8
  $region5: #{basic_block_forward.1} parent=0 // loop_body
    %s17 = ssub.s32 %s12, 1
    %s18 = ssub.s32 %s12, 2
    %s19 = sadd.s32 %s12, 1
    %s20 = ssub.s32 %s12, %s19
    %p21 = scmp.eq.s32.totalorder %s20, 0
    %s23 = sadd.s32 %s22, 1
    %s24 = scalar_select %p21, %s22, %s23
    %p27 = pneg %p21
    %p28 = scmp.eq.s32.totalorder %s12, 1
    %p29 = por %p27, %p28
    %p30 = scmp.ne.s32.totalorder %s22, %s25
    %p31 = scmp.eq.s32.totalorder %s12, 0
    %p32 = por %p30, %p31
    %p33 = scmp.ne.s32.totalorder %s22, %s25
    %p34 = scmp.eq.s32.totalorder %s17, 1
    %p35 = por %p33, %p34
    %p36 = scmp.ne.s32.totalorder %s25, %s26
    %p37 = scmp.eq.s32.totalorder %s17, 0
    %p38 = por %p36, %p37
    %p39 = scmp.ne.s32.totalorder %s25, %s26
    %p40 = scmp.eq.s32.totalorder %s18, 1
    %p41 = por %p39, %p40
    %p43 = scmp.ne.s32.totalorder %s26, %s42
    %p44 = scmp.eq.s32.totalorder %s18, 0
    %p45 = por %p43, %p44
    %s47 = sadd.s32 %s46, 1
    %p50 = scmp.eq.s32.totalorder %s12, 1
    %p51 = scmp.ne.s32.totalorder %s46, %s48
    %p52 = scmp.eq.s32.totalorder %s12, 0
    %p53 = por %p51, %p52
    %p54 = scmp.ne.s32.totalorder %s46, %s48
    %p55 = scmp.eq.s32.totalorder %s17, 1
    %p56 = por %p54, %p55
    %p57 = scmp.ne.s32.totalorder %s48, %s49
    %p58 = scmp.eq.s32.totalorder %s17, 0
    %p59 = por %p57, %p58
    %p60 = scmp.ne.s32.totalorder %s48, %s49
    %p61 = scmp.eq.s32.totalorder %s18, 1
    %p62 = por %p60, %p61
    %p64 = scmp.ne.s32.totalorder %s49, %s63
    %p65 = scmp.eq.s32.totalorder %s18, 0
    %p66 = por %p64, %p65
    %s68 = sadd.s32 %s67, 1
    %p71 = scmp.eq.s32.totalorder %s12, 1
    %p72 = scmp.ne.s32.totalorder %s67, %s69
    %p73 = scmp.eq.s32.totalorder %s12, 0
    %p74 = por %p72, %p73
    %p75 = scmp.ne.s32.totalorder %s67, %s69
    %p76 = scmp.eq.s32.totalorder %s17, 1
    %p77 = por %p75, %p76
    %p78 = scmp.ne.s32.totalorder %s69, %s70
    %p79 = scmp.eq.s32.totalorder %s17, 0
    %p80 = por %p78, %p79
    %p81 = scmp.ne.s32.totalorder %s69, %s70
    %p82 = scmp.eq.s32.totalorder %s18, 1
    %p83 = por %p81, %p82
    %p85 = scmp.ne.s32.totalorder %s70, %s84
    %p86 = scmp.eq.s32.totalorder %s18, 0
    %p87 = por %p85, %p86
    %s89 = sadd.s32 %s88, 1
    %p92 = scmp.eq.s32.totalorder %s12, 1
    %p93 = scmp.ne.s32.totalorder %s88, %s90
    %p94 = scmp.eq.s32.totalorder %s12, 0
    %p95 = por %p93, %p94
    %p96 = scmp.ne.s32.totalorder %s88, %s90
    %p97 = scmp.eq.s32.totalorder %s17, 1
    %p98 = por %p96, %p97
    %p99 = scmp.ne.s32.totalorder %s90, %s91
    %p100 = scmp.eq.s32.totalorder %s17, 0
    %p101 = por %p99, %p100
    %p102 = scmp.ne.s32.totalorder %s90, %s91
    %p103 = scmp.eq.s32.totalorder %s18, 1
    %p104 = por %p102, %p103
    %p106 = scmp.ne.s32.totalorder %s91, %s105
    %p107 = scmp.eq.s32.totalorder %s18, 0
    %p108 = por %p106, %p107
    %s110 = sadd.s32 %s109, 1
    %p113 = scmp.eq.s32.totalorder %s12, 1
    %p114 = scmp.ne.s32.totalorder %s109, %s111
    %p115 = scmp.eq.s32.totalorder %s12, 0
    %p116 = por %p114, %p115
    %p117 = scmp.ne.s32.totalorder %s109, %s111
    %p118 = scmp.eq.s32.totalorder %s17, 1
    %p119 = por %p117, %p118
    %p120 = scmp.ne.s32.totalorder %s111, %s112
    %p121 = scmp.eq.s32.totalorder %s17, 0
    %p122 = por %p120, %p121
    %p123 = scmp.ne.s32.totalorder %s111, %s112
    %p124 = scmp.eq.s32.totalorder %s18, 1
    %p125 = por %p123, %p124
    %p127 = scmp.ne.s32.totalorder %s112, %s126
    %p128 = scmp.eq.s32.totalorder %s18, 0
    %p129 = por %p127, %p128
    %s131 = sadd.s32 %s130, 1
    %p134 = scmp.eq.s32.totalorder %s12, 1
    %p135 = scmp.ne.s32.totalorder %s130, %s132
    %p136 = scmp.eq.s32.totalorder %s12, 0
    %p137 = por %p135, %p136
    %p138 = scmp.ne.s32.totalorder %s130, %s132
    %p139 = scmp.eq.s32.totalorder %s17, 1
    %p140 = por %p138, %p139
    %p141 = scmp.ne.s32.totalorder %s132, %s133
    %p142 = scmp.eq.s32.totalorder %s17, 0
    %p143 = por %p141, %p142
    %p144 = scmp.ne.s32.totalorder %s132, %s133
    %p145 = scmp.eq.s32.totalorder %s18, 1
    %p146 = por %p144, %p145
    %p148 = scmp.ne.s32.totalorder %s133, %s147
    %p149 = scmp.eq.s32.totalorder %s18, 0
    %p150 = por %p148, %p149
    %s151 = ssub.s32 %s12, %s19
    %p152 = scmp.eq.s32.totalorder %s151, 0
    %s154 = sadd.s32 %s153, 1
    %s155 = scalar_select %p152, %s153, %s154
    %p158 = pneg %p152
    %p159 = scmp.eq.s32.totalorder %s12, 1
    %p160 = por %p158, %p159
    %p161 = scmp.ne.s32.totalorder %s153, %s156
    %p162 = scmp.eq.s32.totalorder %s12, 0
    %p163 = por %p161, %p162
    %p164 = scmp.ne.s32.totalorder %s153, %s156
    %p165 = scmp.eq.s32.totalorder %s17, 1
    %p166 = por %p164, %p165
    %p167 = scmp.ne.s32.totalorder %s156, %s157
    %p168 = scmp.eq.s32.totalorder %s17, 0
    %p169 = por %p167, %p168
    %p170 = scmp.ne.s32.totalorder %s156, %s157
    %p171 = scmp.eq.s32.totalorder %s18, 1
    %p172 = por %p170, %p171
    %p174 = scmp.ne.s32.totalorder %s157, %s173
    %p175 = scmp.eq.s32.totalorder %s18, 0
    %p176 = por %p174, %p175
    %p177 = scmp.le.s32.totalorder 1, %s12
    %p178 = scmp.lt.s32.totalorder %s12, 3
    %p179 = pnand %p177, %p178
    %p180 = pneg %p179
    // Predicated region
    $region9: #{basic_block_forward.1} parent=5 // pred_check
      _
    $region10: #{basic_block_forward.1} parent=5 // pred_check_branch
      %182 = sbr.rel (%p179) target = $region12
    $region11: #{basic_block_forward.1} parent=5 // pred_region
      %s183 = ssub.s32 %s12, 1
      // Predicated region
      $region13: #{basic_block_forward.1} parent=11 // pred_check
        %p184 = pneg %p59
      $region14: #{basic_block_forward.1} parent=11 // pred_check_branch
        %186 = sbr.rel (%p184) target = $region16
      $region15: #{basic_block_forward.1} parent=11 // pred_region
        _
      $region16: #{basic_block_forward.1} parent=11 // pred_fallthru
        _
      // Predicated region
      $region17: #{basic_block_forward.1} parent=11 // pred_check
        %p187 = pneg %p80
      $region18: #{basic_block_forward.1} parent=11 // pred_check_branch
        %189 = sbr.rel (%p187) target = $region20
      $region19: #{basic_block_forward.1} parent=11 // pred_region
        _
      $region20: #{basic_block_forward.1} parent=11 // pred_fallthru
        _
      // Predicated region
      $region21: #{basic_block_forward.1} parent=11 // pred_check
        %p190 = pneg %p101
      $region22: #{basic_block_forward.1} parent=11 // pred_check_branch
        %192 = sbr.rel (%p190) target = $region24
      $region23: #{basic_block_forward.1} parent=11 // pred_region
        _
      $region24: #{basic_block_forward.1} parent=11 // pred_fallthru
        _
      // Predicated region
      $region25: #{basic_block_forward.1} parent=11 // pred_check
        %p193 = pneg %p122
      $region26: #{basic_block_forward.1} parent=11 // pred_check_branch
        %195 = sbr.rel (%p193) target = $region28
      $region27: #{basic_block_forward.1} parent=11 // pred_region
        _
      $region28: #{basic_block_forward.1} parent=11 // pred_fallthru
        _
      // Predicated region
      $region29: #{basic_block_forward.1} parent=11 // pred_check
        %p196 = pneg %p143
      $region30: #{basic_block_forward.1} parent=11 // pred_check_branch
        %198 = sbr.rel (%p196) target = $region32
      $region31: #{basic_block_forward.1} parent=11 // pred_region
        _
      $region32: #{basic_block_forward.1} parent=11 // pred_fallthru
        _
    $region12: #{basic_block_forward.1} parent=5 // pred_fallthru
      _
    %p199 = scmp.lt.s32.totalorder %s12, 2
    // Predicated region
    $region33: #{basic_block_forward.1} parent=5 // pred_check
      %p200 = pneg %p199
    $region34: #{basic_block_forward.1} parent=5 // pred_check_branch
      %202 = sbr.rel (%p200) target = $region36
    $region35: #{basic_block_forward.1} parent=5 // pred_region
      // Predicated region
      $region37: #{basic_block_forward.1} parent=35 // pred_check
        %p203 = pneg %p32
      $region38: #{basic_block_forward.1} parent=35 // pred_check_branch
        %205 = sbr.rel (%p203) target = $region40
      $region39: #{basic_block_forward.1} parent=35 // pred_region
        %p206 = scmp.lt.s32.totalorder %s12, 1
        %s207 = scalar_select %p206, %s12, 1
        %s208 = smul.addr %s207, 4
        %s209 = smul.addr %s208, 4
        %s210 = scalar_lea.vmem %s0, %s209
      $region40: #{basic_block_forward.1} parent=35 // pred_fallthru
        _
    $region36: #{basic_block_forward.1} parent=5 // pred_fallthru
      _
    %p211 = scmp.le.s32.totalorder 1, %s12
    %p212 = scmp.lt.s32.totalorder %s12, 3
    %p213 = pnand %p211, %p212
    %p214 = pneg %p213
    // Predicated region
    $region41: #{basic_block_forward.1} parent=5 // pred_check
      _
    $region42: #{basic_block_forward.1} parent=5 // pred_check_branch
      %216 = sbr.rel (%p213) target = $region44
    $region43: #{basic_block_forward.1} parent=5 // pred_region
      %s217 = ssub.s32 %s12, 1
      %p218 = scmp.lt.s32.totalorder %s17, 1
      %s219 = scalar_select %p218, %s17, 1
      %s220 = smul.addr %s219, 4
      %s221 = smul.addr %s220, 4
      %s222 = scalar_lea.vmem %s0, %s221
      %p223 = pneg %p38
      %p224 = pneg %p35
      %p225 = pneg %p59
      %p226 = pneg %p56
      %p227 = pneg %p80
      %p228 = pneg %p77
      %p229 = pneg %p101
      %p230 = pneg %p98
      %p231 = pneg %p122
      %p232 = pneg %p119
      %p233 = pneg %p143
      %p234 = pneg %p140
      %p235 = pneg %p169
      %p236 = pneg %p166
      %p237 = scmp.lt.s32.totalorder %s17, 1
      %s238 = scalar_select %p237, %s17, 1
      %s239 = smul.addr %s238, 3
      %s240 = smul.addr %s239, 4
      %s241 = scalar_lea.vmem %s6, %s240
      %p242 = scmp.lt.s32.totalorder %s17, 1
      %s243 = scalar_select %p242, %s17, 1
      %s244 = smul.addr %s243, 4
      %s245 = smul.addr %s244, 4
      %s246 = scalar_lea.vmem %s0, %s245
      %p247 = scmp.lt.s32.totalorder %s17, 1
      %s248 = scalar_select %p247, %s17, 1
      %s249 = smul.addr %s248, 3
      %s250 = smul.addr %s249, 4
      %s251 = scalar_lea.vmem %s6, %s250
      %v252 = vld [vmem:[%s1] sm:$0x7]
      %v253 = vld [vmem:[%s246] sm:$0xff]
      %v254 = vld [vmem:[%s246 + $0x8] sm:$0xff]
      %v255 = vld [vmem:[%s2] sm:$0xf]
      %v258 = vlaneseq
      %v259 = vshrl.u32 %v258, 7
      %v260 = vsub.s32 0, %v259
      %v261 = vrot.slane %v253, %v260
      %v262 = vlaneseq
      %v263 = vshrl.u32 %v262, 7
      %v264 = vsub.s32 4, %v263
      %v265 = vrot.slane %v253, %v264
      %v266 = vlaneseq
      %v267 = vshrl.u32 %v266, 7
      %v268 = vsub.s32 0, %v267
      %v269 = vrot.slane %v254, %v268
      %v270 = vlaneseq
      %v271 = vshrl.u32 %v270, 7
      %v272 = vsub.s32 4, %v271
      %v273 = vrot.slane %v254, %v272
      %v278 = vlaneseq
      %v279 = vshrl.u32 %v278, 7
      %v280 = vsub.s32 0, %v279
      %v281 = vrot.slane %v261, %v280
      %v282 = vlaneseq
      %v283 = vshrl.u32 %v282, 7
      %v284 = vsub.s32 0, %v283
      %v285 = vrot.slane %v265, %v284
      %v286 = vlaneseq
      %v287 = vshrl.u32 %v286, 7
      %v288 = vsub.s32 0, %v287
      %v289 = vrot.slane %v269, %v288
      %v290 = vlaneseq
      %v291 = vshrl.u32 %v290, 7
      %v292 = vsub.s32 0, %v291
      %v293 = vrot.slane %v273, %v292
      %295 = vset.pattern.permute.xlu0 0
      %296 = vperm.xlu0 %295, %v255
      %v297 = vpop.permute.xlu0 %296
      %v299 = vmul.f32 %v281, %v297
      %v300 = vmul.f32 %v285, %v297
      %v301 = vmul.f32 %v289, %v297
      %v302 = vmul.f32 %v293, %v297
      %v303 = vlaneseq
      %v304 = vshrl.u32 %v303, 7
      %v305 = vsub.s32 1, %v304
      %v306 = vrot.slane %v253, %v305
      %v307 = vlaneseq
      %v308 = vshrl.u32 %v307, 7
      %v309 = vsub.s32 5, %v308
      %v310 = vrot.slane %v253, %v309
      %v311 = vlaneseq
      %v312 = vshrl.u32 %v311, 7
      %v313 = vsub.s32 1, %v312
      %v314 = vrot.slane %v254, %v313
      %v315 = vlaneseq
      %v316 = vshrl.u32 %v315, 7
      %v317 = vsub.s32 5, %v316
      %v318 = vrot.slane %v254, %v317
      %v323 = vlaneseq
      %v324 = vshrl.u32 %v323, 7
      %v325 = vsub.s32 1, %v324
      %v326 = vrot.slane %v306, %v325
      %v327 = vlaneseq
      %v328 = vshrl.u32 %v327, 7
      %v329 = vsub.s32 1, %v328
      %v330 = vrot.slane %v310, %v329
      %v331 = vlaneseq
      %v332 = vshrl.u32 %v331, 7
      %v333 = vsub.s32 1, %v332
      %v334 = vrot.slane %v314, %v333
      %v335 = vlaneseq
      %v336 = vshrl.u32 %v335, 7
      %v337 = vsub.s32 1, %v336
      %v338 = vrot.slane %v318, %v337
      %339 = vset.pattern.permute.xlu0 9
      %340 = vperm.xlu0 %339, %v255
      %v341 = vpop.permute.xlu0 %340
      %v343 = vmul.f32 %v326, %v341
      %v344 = vmul.f32 %v330, %v341
      %v345 = vmul.f32 %v334, %v341
      %v346 = vmul.f32 %v338, %v341
      %v347 = vadd.f32 %v299, %v343
      %v348 = vadd.f32 %v300, %v344
      %v349 = vadd.f32 %v301, %v345
      %v350 = vadd.f32 %v302, %v346
      %v351 = vlaneseq
      %v352 = vshrl.u32 %v351, 7
      %v353 = vsub.s32 2, %v352
      %v354 = vrot.slane %v253, %v353
      %v355 = vlaneseq
      %v356 = vshrl.u32 %v355, 7
      %v357 = vsub.s32 6, %v356
      %v358 = vrot.slane %v253, %v357
      %v359 = vlaneseq
      %v360 = vshrl.u32 %v359, 7
      %v361 = vsub.s32 2, %v360
      %v362 = vrot.slane %v254, %v361
      %v363 = vlaneseq
      %v364 = vshrl.u32 %v363, 7
      %v365 = vsub.s32 6, %v364
      %v366 = vrot.slane %v254, %v365
      %v371 = vlaneseq
      %v372 = vshrl.u32 %v371, 7
      %v373 = vsub.s32 2, %v372
      %v374 = vrot.slane %v354, %v373
      %v375 = vlaneseq
      %v376 = vshrl.u32 %v375, 7
      %v377 = vsub.s32 2, %v376
      %v378 = vrot.slane %v358, %v377
      %v379 = vlaneseq
      %v380 = vshrl.u32 %v379, 7
      %v381 = vsub.s32 2, %v380
      %v382 = vrot.slane %v362, %v381
      %v383 = vlaneseq
      %v384 = vshrl.u32 %v383, 7
      %v385 = vsub.s32 2, %v384
      %v386 = vrot.slane %v366, %v385
      %387 = vset.pattern.permute.xlu0 18
      %388 = vperm.xlu0 %387, %v255
      %v389 = vpop.permute.xlu0 %388
      %v391 = vmul.f32 %v374, %v389
      %v392 = vmul.f32 %v378, %v389
      %v393 = vmul.f32 %v382, %v389
      %v394 = vmul.f32 %v386, %v389
      %v395 = vadd.f32 %v347, %v391
      %v396 = vadd.f32 %v348, %v392
      %v397 = vadd.f32 %v349, %v393
      %v398 = vadd.f32 %v350, %v394
      %v399 = vlaneseq
      %v400 = vshrl.u32 %v399, 7
      %v401 = vsub.s32 3, %v400
      %v402 = vrot.slane %v253, %v401
      %v403 = vlaneseq
      %v404 = vshrl.u32 %v403, 7
      %v405 = vsub.s32 7, %v404
      %v406 = vrot.slane %v253, %v405
      %v407 = vlaneseq
      %v408 = vshrl.u32 %v407, 7
      %v409 = vsub.s32 3, %v408
      %v410 = vrot.slane %v254, %v409
      %v411 = vlaneseq
      %v412 = vshrl.u32 %v411, 7
      %v413 = vsub.s32 7, %v412
      %v414 = vrot.slane %v254, %v413
      %v419 = vlaneseq
      %v420 = vshrl.u32 %v419, 7
      %v421 = vsub.s32 3, %v420
      %v422 = vrot.slane %v402, %v421
      %v423 = vlaneseq
      %v424 = vshrl.u32 %v423, 7
      %v425 = vsub.s32 3, %v424
      %v426 = vrot.slane %v406, %v425
      %v427 = vlaneseq
      %v428 = vshrl.u32 %v427, 7
      %v429 = vsub.s32 3, %v428
      %v430 = vrot.slane %v410, %v429
      %v431 = vlaneseq
      %v432 = vshrl.u32 %v431, 7
      %v433 = vsub.s32 3, %v432
      %v434 = vrot.slane %v414, %v433
      %435 = vset.pattern.permute.xlu0 27
      %436 = vperm.xlu0 %435, %v255
      %v437 = vpop.permute.xlu0 %436
      %v439 = vmul.f32 %v422, %v437
      %v440 = vmul.f32 %v426, %v437
      %v441 = vmul.f32 %v430, %v437
      %v442 = vmul.f32 %v434, %v437
      %v443 = vadd.f32 %v395, %v439
      %v444 = vadd.f32 %v396, %v440
      %v445 = vadd.f32 %v397, %v441
      %v446 = vadd.f32 %v398, %v442
      %447 = vset.pattern.permute.xlu0 1
      %448 = vperm.xlu0 %447, %v255
      %v449 = vpop.permute.xlu0 %448
      %v451 = vmul.f32 %v281, %v449
      %v452 = vmul.f32 %v285, %v449
      %v453 = vmul.f32 %v289, %v449
      %v454 = vmul.f32 %v293, %v449
      %459 = vrot.lane.b32.xlu0 %v451, 127
      %v460 = vpop.permute.xlu0 %459
      %461 = vrot.lane.b32.xlu0 %v452, 127
      %v462 = vpop.permute.xlu0 %461
      %463 = vrot.lane.b32.xlu0 %v453, 127
      %v464 = vpop.permute.xlu0 %463
      %465 = vrot.lane.b32.xlu0 %v454, 127
      %v466 = vpop.permute.xlu0 %465
      %vm467 = vcmask 1039360
      %v468 = vsel %vm467, %v460, %v462
      %v469 = vsel %vm467, %v462, %v464
      %v470 = vsel %vm467, %v464, %v466
      %v475 = vadd.f32 %v443, %v468
      %v476 = vadd.f32 %v444, %v469
      %v477 = vadd.f32 %v445, %v470
      %v478 = vadd.f32 %v446, %v466
      %479 = vset.pattern.permute.xlu0 10
      %480 = vperm.xlu0 %479, %v255
      %v481 = vpop.permute.xlu0 %480
      %v483 = vmul.f32 %v326, %v481
      %v484 = vmul.f32 %v330, %v481
      %v485 = vmul.f32 %v334, %v481
      %v486 = vmul.f32 %v338, %v481
      %491 = vrot.lane.b32.xlu0 %v483, 127
      %v492 = vpop.permute.xlu0 %491
      %493 = vrot.lane.b32.xlu0 %v484, 127
      %v494 = vpop.permute.xlu0 %493
      %495 = vrot.lane.b32.xlu0 %v485, 127
      %v496 = vpop.permute.xlu0 %495
      %497 = vrot.lane.b32.xlu0 %v486, 127
      %v498 = vpop.permute.xlu0 %497
      %v499 = vsel %vm467, %v492, %v494
      %v500 = vsel %vm467, %v494, %v496
      %v501 = vsel %vm467, %v496, %v498
      %v506 = vadd.f32 %v475, %v499
      %v507 = vadd.f32 %v476, %v500
      %v508 = vadd.f32 %v477, %v501
      %v509 = vadd.f32 %v478, %v498
      %510 = vset.pattern.permute.xlu0 19
      %511 = vperm.xlu0 %510, %v255
      %v512 = vpop.permute.xlu0 %511
      %v514 = vmul.f32 %v374, %v512
      %v515 = vmul.f32 %v378, %v512
      %v516 = vmul.f32 %v382, %v512
      %v517 = vmul.f32 %v386, %v512
      %522 = vrot.lane.b32.xlu0 %v514, 127
      %v523 = vpop.permute.xlu0 %522
      %524 = vrot.lane.b32.xlu0 %v515, 127
      %v525 = vpop.permute.xlu0 %524
      %526 = vrot.lane.b32.xlu0 %v516, 127
      %v527 = vpop.permute.xlu0 %526
      %528 = vrot.lane.b32.xlu0 %v517, 127
      %v529 = vpop.permute.xlu0 %528
      %v530 = vsel %vm467, %v523, %v525
      %v531 = vsel %vm467, %v525, %v527
      %v532 = vsel %vm467, %v527, %v529
      %v537 = vadd.f32 %v506, %v530
      %v538 = vadd.f32 %v507, %v531
      %v539 = vadd.f32 %v508, %v532
      %v540 = vadd.f32 %v509, %v529
      %541 = vset.pattern.permute.xlu0 28
      %542 = vperm.xlu0 %541, %v255
      %v543 = vpop.permute.xlu0 %542
      %v545 = vmul.f32 %v422, %v543
      %v546 = vmul.f32 %v426, %v543
      %v547 = vmul.f32 %v430, %v543
      %v548 = vmul.f32 %v434, %v543
      %553 = vrot.lane.b32.xlu0 %v545, 127
      %v554 = vpop.permute.xlu0 %553
      %555 = vrot.lane.b32.xlu0 %v546, 127
      %v556 = vpop.permute.xlu0 %555
      %557 = vrot.lane.b32.xlu0 %v547, 127
      %v558 = vpop.permute.xlu0 %557
      %559 = vrot.lane.b32.xlu0 %v548, 127
      %v560 = vpop.permute.xlu0 %559
      %v561 = vsel %vm467, %v554, %v556
      %v562 = vsel %vm467, %v556, %v558
      %v563 = vsel %vm467, %v558, %v560
      %v568 = vadd.f32 %v537, %v561
      %v569 = vadd.f32 %v538, %v562
      %v570 = vadd.f32 %v539, %v563
      %v571 = vadd.f32 %v540, %v560
      %572 = vset.pattern.permute.xlu0 2
      %573 = vperm.xlu0 %572, %v255
      %v574 = vpop.permute.xlu0 %573
      %v576 = vmul.f32 %v281, %v574
      %v577 = vmul.f32 %v285, %v574
      %v578 = vmul.f32 %v289, %v574
      %v579 = vmul.f32 %v293, %v574
      %584 = vrot.lane.b32.xlu0 %v576, 126
      %v585 = vpop.permute.xlu0 %584
      %586 = vrot.lane.b32.xlu0 %v577, 126
      %v587 = vpop.permute.xlu0 %586
      %588 = vrot.lane.b32.xlu0 %v578, 126
      %v589 = vpop.permute.xlu0 %588
      %590 = vrot.lane.b32.xlu0 %v579, 126
      %v591 = vpop.permute.xlu0 %590
      %vm592 = vcmask 1031168
      %v593 = vsel %vm592, %v585, %v587
      %v594 = vsel %vm592, %v587, %v589
      %v595 = vsel %vm592, %v589, %v591
      %v600 = vadd.f32 %v568, %v593
      %v601 = vadd.f32 %v569, %v594
      %v602 = vadd.f32 %v570, %v595
      %v603 = vadd.f32 %v571, %v591
      %604 = vset.pattern.permute.xlu0 11
      %605 = vperm.xlu0 %604, %v255
      %v606 = vpop.permute.xlu0 %605
      %v608 = vmul.f32 %v326, %v606
      %v609 = vmul.f32 %v330, %v606
      %v610 = vmul.f32 %v334, %v606
      %v611 = vmul.f32 %v338, %v606
      %616 = vrot.lane.b32.xlu0 %v608, 126
      %v617 = vpop.permute.xlu0 %616
      %618 = vrot.lane.b32.xlu0 %v609, 126
      %v619 = vpop.permute.xlu0 %618
      %620 = vrot.lane.b32.xlu0 %v610, 126
      %v621 = vpop.permute.xlu0 %620
      %622 = vrot.lane.b32.xlu0 %v611, 126
      %v623 = vpop.permute.xlu0 %622
      %v624 = vsel %vm592, %v617, %v619
      %v625 = vsel %vm592, %v619, %v621
      %v626 = vsel %vm592, %v621, %v623
      %v631 = vadd.f32 %v600, %v624
      %v632 = vadd.f32 %v601, %v625
      %v633 = vadd.f32 %v602, %v626
      %v634 = vadd.f32 %v603, %v623
      %635 = vset.pattern.permute.xlu0 20
      %636 = vperm.xlu0 %635, %v255
      %v637 = vpop.permute.xlu0 %636
      %v639 = vmul.f32 %v374, %v637
      %v640 = vmul.f32 %v378, %v637
      %v641 = vmul.f32 %v382, %v637
      %v642 = vmul.f32 %v386, %v637
      %647 = vrot.lane.b32.xlu0 %v639, 126
      %v648 = vpop.permute.xlu0 %647
      %649 = vrot.lane.b32.xlu0 %v640, 126
      %v650 = vpop.permute.xlu0 %649
      %651 = vrot.lane.b32.xlu0 %v641, 126
      %v652 = vpop.permute.xlu0 %651
      %653 = vrot.lane.b32.xlu0 %v642, 126
      %v654 = vpop.permute.xlu0 %653
      %v655 = vsel %vm592, %v648, %v650
      %v656 = vsel %vm592, %v650, %v652
      %v657 = vsel %vm592, %v652, %v654
      %v662 = vadd.f32 %v631, %v655
      %v663 = vadd.f32 %v632, %v656
      %v664 = vadd.f32 %v633, %v657
      %v665 = vadd.f32 %v634, %v654
      %666 = vset.pattern.permute.xlu0 29
      %667 = vperm.xlu0 %666, %v255
      %v668 = vpop.permute.xlu0 %667
      %v670 = vmul.f32 %v422, %v668
      %v671 = vmul.f32 %v426, %v668
      %v672 = vmul.f32 %v430, %v668
      %v673 = vmul.f32 %v434, %v668
      %678 = vrot.lane.b32.xlu0 %v670, 126
      %v679 = vpop.permute.xlu0 %678
      %680 = vrot.lane.b32.xlu0 %v671, 126
      %v681 = vpop.permute.xlu0 %680
      %682 = vrot.lane.b32.xlu0 %v672, 126
      %v683 = vpop.permute.xlu0 %682
      %684 = vrot.lane.b32.xlu0 %v673, 126
      %v685 = vpop.permute.xlu0 %684
      %v686 = vsel %vm592, %v679, %v681
      %v687 = vsel %vm592, %v681, %v683
      %v688 = vsel %vm592, %v683, %v685
      %v693 = vadd.f32 %v662, %v686
      %v694 = vadd.f32 %v663, %v687
      %v695 = vadd.f32 %v664, %v688
      %v696 = vadd.f32 %v665, %v685
      %697 = vset.pattern.permute.xlu0 3
      %698 = vperm.xlu0 %697, %v255
      %v699 = vpop.permute.xlu0 %698
      %v701 = vmul.f32 %v281, %v699
      %v702 = vmul.f32 %v285, %v699
      %v703 = vmul.f32 %v289, %v699
      %v704 = vmul.f32 %v293, %v699
      %709 = vrot.lane.b32.xlu0 %v701, 110
      %v710 = vpop.permute.xlu0 %709
      %711 = vrot.lane.b32.xlu0 %v702, 110
      %v712 = vpop.permute.xlu0 %711
      %713 = vrot.lane.b32.xlu0 %v703, 110
      %v714 = vpop.permute.xlu0 %713
      %715 = vrot.lane.b32.xlu0 %v704, 110
      %v716 = vpop.permute.xlu0 %715
      %vm717 = vcmask 900096
      %v718 = vsel %vm717, %v710, %v712
      %v719 = vsel %vm717, %v712, %v714
      %v720 = vsel %vm717, %v714, %v716
      %v725 = vadd.f32 %v693, %v718
      %v726 = vadd.f32 %v694, %v719
      %v727 = vadd.f32 %v695, %v720
      %v728 = vadd.f32 %v696, %v716
      %729 = vset.pattern.permute.xlu0 12
      %730 = vperm.xlu0 %729, %v255
      %v731 = vpop.permute.xlu0 %730
      %v733 = vmul.f32 %v326, %v731
      %v734 = vmul.f32 %v330, %v731
      %v735 = vmul.f32 %v334, %v731
      %v736 = vmul.f32 %v338, %v731
      %741 = vrot.lane.b32.xlu0 %v733, 110
      %v742 = vpop.permute.xlu0 %741
      %743 = vrot.lane.b32.xlu0 %v734, 110
      %v744 = vpop.permute.xlu0 %743
      %745 = vrot.lane.b32.xlu0 %v735, 110
      %v746 = vpop.permute.xlu0 %745
      %747 = vrot.lane.b32.xlu0 %v736, 110
      %v748 = vpop.permute.xlu0 %747
      %v749 = vsel %vm717, %v742, %v744
      %v750 = vsel %vm717, %v744, %v746
      %v751 = vsel %vm717, %v746, %v748
      %v756 = vadd.f32 %v725, %v749
      %v757 = vadd.f32 %v726, %v750
      %v758 = vadd.f32 %v727, %v751
      %v759 = vadd.f32 %v728, %v748
      %760 = vset.pattern.permute.xlu0 21
      %761 = vperm.xlu0 %760, %v255
      %v762 = vpop.permute.xlu0 %761
      %v764 = vmul.f32 %v374, %v762
      %v765 = vmul.f32 %v378, %v762
      %v766 = vmul.f32 %v382, %v762
      %v767 = vmul.f32 %v386, %v762
      %772 = vrot.lane.b32.xlu0 %v764, 110
      %v773 = vpop.permute.xlu0 %772
      %774 = vrot.lane.b32.xlu0 %v765, 110
      %v775 = vpop.permute.xlu0 %774
      %776 = vrot.lane.b32.xlu0 %v766, 110
      %v777 = vpop.permute.xlu0 %776
      %778 = vrot.lane.b32.xlu0 %v767, 110
      %v779 = vpop.permute.xlu0 %778
      %v780 = vsel %vm717, %v773, %v775
      %v781 = vsel %vm717, %v775, %v777
      %v782 = vsel %vm717, %v777, %v779
      %v787 = vadd.f32 %v756, %v780
      %v788 = vadd.f32 %v757, %v781
      %v789 = vadd.f32 %v758, %v782
      %v790 = vadd.f32 %v759, %v779
      %791 = vset.pattern.permute.xlu0 30
      %792 = vperm.xlu0 %791, %v255
      %v793 = vpop.permute.xlu0 %792
      %v795 = vmul.f32 %v422, %v793
      %v796 = vmul.f32 %v426, %v793
      %v797 = vmul.f32 %v430, %v793
      %v798 = vmul.f32 %v434, %v793
      %803 = vrot.lane.b32.xlu0 %v795, 110
      %v804 = vpop.permute.xlu0 %803
      %805 = vrot.lane.b32.xlu0 %v796, 110
      %v806 = vpop.permute.xlu0 %805
      %807 = vrot.lane.b32.xlu0 %v797, 110
      %v808 = vpop.permute.xlu0 %807
      %809 = vrot.lane.b32.xlu0 %v798, 110
      %v810 = vpop.permute.xlu0 %809
      %v811 = vsel %vm717, %v804, %v806
      %v812 = vsel %vm717, %v806, %v808
      %v813 = vsel %vm717, %v808, %v810
      %v818 = vadd.f32 %v787, %v811
      %v819 = vadd.f32 %v788, %v812
      %v820 = vadd.f32 %v789, %v813
      %v821 = vadd.f32 %v790, %v810
      %v822 = vld [vmem:[%s246 + $0x4] sm:$0xff]
      %v823 = vld [vmem:[%s246 + $0xc] sm:$0xf]
      %v826 = vlaneseq
      %v827 = vshrl.u32 %v826, 7
      %v828 = vsub.s32 0, %v827
      %v829 = vrot.slane %v822, %v828
      %v830 = vlaneseq
      %v831 = vshrl.u32 %v830, 7
      %v832 = vsub.s32 4, %v831
      %v833 = vrot.slane %v822, %v832
      %v834 = vlaneseq
      %v835 = vshrl.u32 %v834, 7
      %v836 = vsub.s32 0, %v835
      %v837 = vrot.slane %v823, %v836
      %v841 = vlaneseq
      %v842 = vshrl.u32 %v841, 7
      %v843 = vsub.s32 0, %v842
      %v844 = vrot.slane %v829, %v843
      %v845 = vlaneseq
      %v846 = vshrl.u32 %v845, 7
      %v847 = vsub.s32 0, %v846
      %v848 = vrot.slane %v833, %v847
      %v849 = vlaneseq
      %v850 = vshrl.u32 %v849, 7
      %v851 = vsub.s32 0, %v850
      %v852 = vrot.slane %v837, %v851
      %853 = vset.pattern.permute.xlu0 4
      %854 = vperm.xlu0 %853, %v255
      %v855 = vpop.permute.xlu0 %854
      %v857 = vmul.f32 %v844, %v855
      %v858 = vmul.f32 %v848, %v855
      %v859 = vmul.f32 %v852, %v855
      %863 = vrot.lane.b32.xlu0 %v857, 109
      %v864 = vpop.permute.xlu0 %863
      %865 = vrot.lane.b32.xlu0 %v858, 109
      %v866 = vpop.permute.xlu0 %865
      %867 = vrot.lane.b32.xlu0 %v859, 109
      %v868 = vpop.permute.xlu0 %867
      %vm869 = vcmask 891904
      %v870 = vsel %vm869, %v864, %v866
      %v871 = vsel %vm869, %v866, %v868
      %v876 = vadd.f32 %v818, %v864
      %v877 = vadd.f32 %v819, %v870
      %v878 = vadd.f32 %v820, %v871
      %v879 = vadd.f32 %v821, %v868
      %v880 = vlaneseq
      %v881 = vshrl.u32 %v880, 7
      %v882 = vsub.s32 1, %v881
      %v883 = vrot.slane %v822, %v882
      %v884 = vlaneseq
      %v885 = vshrl.u32 %v884, 7
      %v886 = vsub.s32 5, %v885
      %v887 = vrot.slane %v822, %v886
      %v888 = vlaneseq
      %v889 = vshrl.u32 %v888, 7
      %v890 = vsub.s32 1, %v889
      %v891 = vrot.slane %v823, %v890
      %v895 = vlaneseq
      %v896 = vshrl.u32 %v895, 7
      %v897 = vsub.s32 1, %v896
      %v898 = vrot.slane %v883, %v897
      %v899 = vlaneseq
      %v900 = vshrl.u32 %v899, 7
      %v901 = vsub.s32 1, %v900
      %v902 = vrot.slane %v887, %v901
      %v903 = vlaneseq
      %v904 = vshrl.u32 %v903, 7
      %v905 = vsub.s32 1, %v904
      %v906 = vrot.slane %v891, %v905
      %907 = vset.pattern.permute.xlu0 13
      %908 = vperm.xlu0 %907, %v255
      %v909 = vpop.permute.xlu0 %908
      %v911 = vmul.f32 %v898, %v909
      %v912 = vmul.f32 %v902, %v909
      %v913 = vmul.f32 %v906, %v909
      %917 = vrot.lane.b32.xlu0 %v911, 109
      %v918 = vpop.permute.xlu0 %917
      %919 = vrot.lane.b32.xlu0 %v912, 109
      %v920 = vpop.permute.xlu0 %919
      %921 = vrot.lane.b32.xlu0 %v913, 109
      %v922 = vpop.permute.xlu0 %921
      %v923 = vsel %vm869, %v918, %v920
      %v924 = vsel %vm869, %v920, %v922
      %v929 = vadd.f32 %v876, %v918
      %v930 = vadd.f32 %v877, %v923
      %v931 = vadd.f32 %v878, %v924
      %v932 = vadd.f32 %v879, %v922
      %v933 = vlaneseq
      %v934 = vshrl.u32 %v933, 7
      %v935 = vsub.s32 2, %v934
      %v936 = vrot.slane %v822, %v935
      %v937 = vlaneseq
      %v938 = vshrl.u32 %v937, 7
      %v939 = vsub.s32 6, %v938
      %v940 = vrot.slane %v822, %v939
      %v941 = vlaneseq
      %v942 = vshrl.u32 %v941, 7
      %v943 = vsub.s32 2, %v942
      %v944 = vrot.slane %v823, %v943
      %v948 = vlaneseq
      %v949 = vshrl.u32 %v948, 7
      %v950 = vsub.s32 2, %v949
      %v951 = vrot.slane %v936, %v950
      %v952 = vlaneseq
      %v953 = vshrl.u32 %v952, 7
      %v954 = vsub.s32 2, %v953
      %v955 = vrot.slane %v940, %v954
      %v956 = vlaneseq
      %v957 = vshrl.u32 %v956, 7
      %v958 = vsub.s32 2, %v957
      %v959 = vrot.slane %v944, %v958
      %960 = vset.pattern.permute.xlu0 22
      %961 = vperm.xlu0 %960, %v255
      %v962 = vpop.permute.xlu0 %961
      %v964 = vmul.f32 %v951, %v962
      %v965 = vmul.f32 %v955, %v962
      %v966 = vmul.f32 %v959, %v962
      %970 = vrot.lane.b32.xlu0 %v964, 109
      %v971 = vpop.permute.xlu0 %970
      %972 = vrot.lane.b32.xlu0 %v965, 109
      %v973 = vpop.permute.xlu0 %972
      %974 = vrot.lane.b32.xlu0 %v966, 109
      %v975 = vpop.permute.xlu0 %974
      %v976 = vsel %vm869, %v971, %v973
      %v977 = vsel %vm869, %v973, %v975
      %v982 = vadd.f32 %v929, %v971
      %v983 = vadd.f32 %v930, %v976
      %v984 = vadd.f32 %v931, %v977
      %v985 = vadd.f32 %v932, %v975
      %v986 = vlaneseq
      %v987 = vshrl.u32 %v986, 7
      %v988 = vsub.s32 3, %v987
      %v989 = vrot.slane %v822, %v988
      %v990 = vlaneseq
      %v991 = vshrl.u32 %v990, 7
      %v992 = vsub.s32 7, %v991
      %v993 = vrot.slane %v822, %v992
      %v994 = vlaneseq
      %v995 = vshrl.u32 %v994, 7
      %v996 = vsub.s32 3, %v995
      %v997 = vrot.slane %v823, %v996
      %v1001 = vlaneseq
      %v1002 = vshrl.u32 %v1001, 7
      %v1003 = vsub.s32 3, %v1002
      %v1004 = vrot.slane %v989, %v1003
      %v1005 = vlaneseq
      %v1006 = vshrl.u32 %v1005, 7
      %v1007 = vsub.s32 3, %v1006
      %v1008 = vrot.slane %v993, %v1007
      %v1009 = vlaneseq
      %v1010 = vshrl.u32 %v1009, 7
      %v1011 = vsub.s32 3, %v1010
      %v1012 = vrot.slane %v997, %v1011
      %1013 = vset.pattern.permute.xlu0 31
      %1014 = vperm.xlu0 %1013, %v255
      %v1015 = vpop.permute.xlu0 %1014
      %v1017 = vmul.f32 %v1004, %v1015
      %v1018 = vmul.f32 %v1008, %v1015
      %v1019 = vmul.f32 %v1012, %v1015
      %1023 = vrot.lane.b32.xlu0 %v1017, 109
      %v1024 = vpop.permute.xlu0 %1023
      %1025 = vrot.lane.b32.xlu0 %v1018, 109
      %v1026 = vpop.permute.xlu0 %1025
      %1027 = vrot.lane.b32.xlu0 %v1019, 109
      %v1028 = vpop.permute.xlu0 %1027
      %v1029 = vsel %vm869, %v1024, %v1026
      %v1030 = vsel %vm869, %v1026, %v1028
      %v1035 = vadd.f32 %v982, %v1024
      %v1036 = vadd.f32 %v983, %v1029
      %v1037 = vadd.f32 %v984, %v1030
      %v1038 = vadd.f32 %v985, %v1028
      %1039 = vset.pattern.permute.xlu0 5
      %1040 = vperm.xlu0 %1039, %v255
      %v1041 = vpop.permute.xlu0 %1040
      %v1043 = vmul.f32 %v844, %v1041
      %v1044 = vmul.f32 %v848, %v1041
      %v1045 = vmul.f32 %v852, %v1041
      %1049 = vrot.lane.b32.xlu0 %v1043, 108
      %v1050 = vpop.permute.xlu0 %1049
      %1051 = vrot.lane.b32.xlu0 %v1044, 108
      %v1052 = vpop.permute.xlu0 %1051
      %1053 = vrot.lane.b32.xlu0 %v1045, 108
      %v1054 = vpop.permute.xlu0 %1053
      %vm1055 = vcmask 883712
      %v1056 = vsel %vm1055, %v1050, %v1052
      %v1057 = vsel %vm1055, %v1052, %v1054
      %v1062 = vadd.f32 %v1035, %v1050
      %v1063 = vadd.f32 %v1036, %v1056
      %v1064 = vadd.f32 %v1037, %v1057
      %v1065 = vadd.f32 %v1038, %v1054
      %1066 = vset.pattern.permute.xlu0 14
      %1067 = vperm.xlu0 %1066, %v255
      %v1068 = vpop.permute.xlu0 %1067
      %v1070 = vmul.f32 %v898, %v1068
      %v1071 = vmul.f32 %v902, %v1068
      %v1072 = vmul.f32 %v906, %v1068
      %1076 = vrot.lane.b32.xlu0 %v1070, 108
      %v1077 = vpop.permute.xlu0 %1076
      %1078 = vrot.lane.b32.xlu0 %v1071, 108
      %v1079 = vpop.permute.xlu0 %1078
      %1080 = vrot.lane.b32.xlu0 %v1072, 108
      %v1081 = vpop.permute.xlu0 %1080
      %v1082 = vsel %vm1055, %v1077, %v1079
      %v1083 = vsel %vm1055, %v1079, %v1081
      %v1088 = vadd.f32 %v1062, %v1077
      %v1089 = vadd.f32 %v1063, %v1082
      %v1090 = vadd.f32 %v1064, %v1083
      %v1091 = vadd.f32 %v1065, %v1081
      %1092 = vset.pattern.permute.xlu0 23
      %1093 = vperm.xlu0 %1092, %v255
      %v1094 = vpop.permute.xlu0 %1093
      %v1096 = vmul.f32 %v951, %v1094
      %v1097 = vmul.f32 %v955, %v1094
      %v1098 = vmul.f32 %v959, %v1094
      %1102 = vrot.lane.b32.xlu0 %v1096, 108
      %v1103 = vpop.permute.xlu0 %1102
      %1104 = vrot.lane.b32.xlu0 %v1097, 108
      %v1105 = vpop.permute.xlu0 %1104
      %1106 = vrot.lane.b32.xlu0 %v1098, 108
      %v1107 = vpop.permute.xlu0 %1106
      %v1108 = vsel %vm1055, %v1103, %v1105
      %v1109 = vsel %vm1055, %v1105, %v1107
      %v1114 = vadd.f32 %v1088, %v1103
      %v1115 = vadd.f32 %v1089, %v1108
      %v1116 = vadd.f32 %v1090, %v1109
      %v1117 = vadd.f32 %v1091, %v1107
      %1118 = vset.pattern.permute.xlu0 32
      %1119 = vperm.xlu0 %1118, %v255
      %v1120 = vpop.permute.xlu0 %1119
      %v1122 = vmul.f32 %v1004, %v1120
      %v1123 = vmul.f32 %v1008, %v1120
      %v1124 = vmul.f32 %v1012, %v1120
      %1128 = vrot.lane.b32.xlu0 %v1122, 108
      %v1129 = vpop.permute.xlu0 %1128
      %1130 = vrot.lane.b32.xlu0 %v1123, 108
      %v1131 = vpop.permute.xlu0 %1130
      %1132 = vrot.lane.b32.xlu0 %v1124, 108
      %v1133 = vpop.permute.xlu0 %1132
      %v1134 = vsel %vm1055, %v1129, %v1131
      %v1135 = vsel %vm1055, %v1131, %v1133
      %v1140 = vadd.f32 %v1114, %v1129
      %v1141 = vadd.f32 %v1115, %v1134
      %v1142 = vadd.f32 %v1116, %v1135
      %v1143 = vadd.f32 %v1117, %v1133
      %1144 = vset.pattern.permute.xlu0 6
      %1145 = vperm.xlu0 %1144, %v255
      %v1146 = vpop.permute.xlu0 %1145
      %v1148 = vmul.f32 %v844, %v1146
      %v1149 = vmul.f32 %v848, %v1146
      %v1150 = vmul.f32 %v852, %v1146
      %1154 = vrot.lane.b32.xlu0 %v1148, 92
      %v1155 = vpop.permute.xlu0 %1154
      %1156 = vrot.lane.b32.xlu0 %v1149, 92
      %v1157 = vpop.permute.xlu0 %1156
      %1158 = vrot.lane.b32.xlu0 %v1150, 92
      %v1159 = vpop.permute.xlu0 %1158
      %vm1160 = vcmask 752640
      %v1161 = vsel %vm1160, %v1155, %v1157
      %v1162 = vsel %vm1160, %v1157, %v1159
      %v1167 = vadd.f32 %v1140, %v1155
      %v1168 = vadd.f32 %v1141, %v1161
      %v1169 = vadd.f32 %v1142, %v1162
      %v1170 = vadd.f32 %v1143, %v1159
      %1171 = vset.pattern.permute.xlu0 15
      %1172 = vperm.xlu0 %1171, %v255
      %v1173 = vpop.permute.xlu0 %1172
      %v1175 = vmul.f32 %v898, %v1173
      %v1176 = vmul.f32 %v902, %v1173
      %v1177 = vmul.f32 %v906, %v1173
      %1181 = vrot.lane.b32.xlu0 %v1175, 92
      %v1182 = vpop.permute.xlu0 %1181
      %1183 = vrot.lane.b32.xlu0 %v1176, 92
      %v1184 = vpop.permute.xlu0 %1183
      %1185 = vrot.lane.b32.xlu0 %v1177, 92
      %v1186 = vpop.permute.xlu0 %1185
      %v1187 = vsel %vm1160, %v1182, %v1184
      %v1188 = vsel %vm1160, %v1184, %v1186
      %v1193 = vadd.f32 %v1167, %v1182
      %v1194 = vadd.f32 %v1168, %v1187
      %v1195 = vadd.f32 %v1169, %v1188
      %v1196 = vadd.f32 %v1170, %v1186
      %1197 = vset.pattern.permute.xlu0 24
      %1198 = vperm.xlu0 %1197, %v255
      %v1199 = vpop.permute.xlu0 %1198
      %v1201 = vmul.f32 %v951, %v1199
      %v1202 = vmul.f32 %v955, %v1199
      %v1203 = vmul.f32 %v959, %v1199
      %1207 = vrot.lane.b32.xlu0 %v1201, 92
      %v1208 = vpop.permute.xlu0 %1207
      %1209 = vrot.lane.b32.xlu0 %v1202, 92
      %v1210 = vpop.permute.xlu0 %1209
      %1211 = vrot.lane.b32.xlu0 %v1203, 92
      %v1212 = vpop.permute.xlu0 %1211
      %v1213 = vsel %vm1160, %v1208, %v1210
      %v1214 = vsel %vm1160, %v1210, %v1212
      %v1219 = vadd.f32 %v1193, %v1208
      %v1220 = vadd.f32 %v1194, %v1213
      %v1221 = vadd.f32 %v1195, %v1214
      %v1222 = vadd.f32 %v1196, %v1212
      %1223 = vset.pattern.permute.xlu0 33
      %1224 = vperm.xlu0 %1223, %v255
      %v1225 = vpop.permute.xlu0 %1224
      %v1227 = vmul.f32 %v1004, %v1225
      %v1228 = vmul.f32 %v1008, %v1225
      %v1229 = vmul.f32 %v1012, %v1225
      %1233 = vrot.lane.b32.xlu0 %v1227, 92
      %v1234 = vpop.permute.xlu0 %1233
      %1235 = vrot.lane.b32.xlu0 %v1228, 92
      %v1236 = vpop.permute.xlu0 %1235
      %1237 = vrot.lane.b32.xlu0 %v1229, 92
      %v1238 = vpop.permute.xlu0 %1237
      %v1239 = vsel %vm1160, %v1234, %v1236
      %v1240 = vsel %vm1160, %v1236, %v1238
      %v1245 = vadd.f32 %v1219, %v1234
      %v1246 = vadd.f32 %v1220, %v1239
      %v1247 = vadd.f32 %v1221, %v1240
      %v1248 = vadd.f32 %v1222, %v1238
      %1249 = vset.pattern.permute.xlu0 7
      %1250 = vperm.xlu0 %1249, %v255
      %v1251 = vpop.permute.xlu0 %1250
      %v1253 = vmul.f32 %v844, %v1251
      %v1254 = vmul.f32 %v848, %v1251
      %v1255 = vmul.f32 %v852, %v1251
      %1259 = vrot.lane.b32.xlu0 %v1253, 91
      %v1260 = vpop.permute.xlu0 %1259
      %1261 = vrot.lane.b32.xlu0 %v1254, 91
      %v1262 = vpop.permute.xlu0 %1261
      %1263 = vrot.lane.b32.xlu0 %v1255, 91
      %v1264 = vpop.permute.xlu0 %1263
      %vm1265 = vcmask 744448
      %v1266 = vsel %vm1265, %v1260, %v1262
      %v1267 = vsel %vm1265, %v1262, %v1264
      %v1272 = vadd.f32 %v1245, %v1260
      %v1273 = vadd.f32 %v1246, %v1266
      %v1274 = vadd.f32 %v1247, %v1267
      %v1275 = vadd.f32 %v1248, %v1264
      %1276 = vset.pattern.permute.xlu0 16
      %1277 = vperm.xlu0 %1276, %v255
      %v1278 = vpop.permute.xlu0 %1277
      %v1280 = vmul.f32 %v898, %v1278
      %v1281 = vmul.f32 %v902, %v1278
      %v1282 = vmul.f32 %v906, %v1278
      %1286 = vrot.lane.b32.xlu0 %v1280, 91
      %v1287 = vpop.permute.xlu0 %1286
      %1288 = vrot.lane.b32.xlu0 %v1281, 91
      %v1289 = vpop.permute.xlu0 %1288
      %1290 = vrot.lane.b32.xlu0 %v1282, 91
      %v1291 = vpop.permute.xlu0 %1290
      %v1292 = vsel %vm1265, %v1287, %v1289
      %v1293 = vsel %vm1265, %v1289, %v1291
      %v1298 = vadd.f32 %v1272, %v1287
      %v1299 = vadd.f32 %v1273, %v1292
      %v1300 = vadd.f32 %v1274, %v1293
      %v1301 = vadd.f32 %v1275, %v1291
      %1302 = vset.pattern.permute.xlu0 25
      %1303 = vperm.xlu0 %1302, %v255
      %v1304 = vpop.permute.xlu0 %1303
      %v1306 = vmul.f32 %v951, %v1304
      %v1307 = vmul.f32 %v955, %v1304
      %v1308 = vmul.f32 %v959, %v1304
      %1312 = vrot.lane.b32.xlu0 %v1306, 91
      %v1313 = vpop.permute.xlu0 %1312
      %1314 = vrot.lane.b32.xlu0 %v1307, 91
      %v1315 = vpop.permute.xlu0 %1314
      %1316 = vrot.lane.b32.xlu0 %v1308, 91
      %v1317 = vpop.permute.xlu0 %1316
      %v1318 = vsel %vm1265, %v1313, %v1315
      %v1319 = vsel %vm1265, %v1315, %v1317
      %v1324 = vadd.f32 %v1298, %v1313
      %v1325 = vadd.f32 %v1299, %v1318
      %v1326 = vadd.f32 %v1300, %v1319
      %v1327 = vadd.f32 %v1301, %v1317
      %1328 = vset.pattern.permute.xlu0 34
      %1329 = vperm.xlu0 %1328, %v255
      %v1330 = vpop.permute.xlu0 %1329
      %v1332 = vmul.f32 %v1004, %v1330
      %v1333 = vmul.f32 %v1008, %v1330
      %v1334 = vmul.f32 %v1012, %v1330
      %1338 = vrot.lane.b32.xlu0 %v1332, 91
      %v1339 = vpop.permute.xlu0 %1338
      %1340 = vrot.lane.b32.xlu0 %v1333, 91
      %v1341 = vpop.permute.xlu0 %1340
      %1342 = vrot.lane.b32.xlu0 %v1334, 91
      %v1343 = vpop.permute.xlu0 %1342
      %v1344 = vsel %vm1265, %v1339, %v1341
      %v1345 = vsel %vm1265, %v1341, %v1343
      %v1350 = vadd.f32 %v1324, %v1339
      %v1351 = vadd.f32 %v1325, %v1344
      %v1352 = vadd.f32 %v1326, %v1345
      %v1353 = vadd.f32 %v1327, %v1343
      %1354 = vset.pattern.permute.xlu0 8
      %1355 = vperm.xlu0 %1354, %v255
      %v1356 = vpop.permute.xlu0 %1355
      %v1358 = vmul.f32 %v844, %v1356
      %v1359 = vmul.f32 %v848, %v1356
      %v1360 = vmul.f32 %v852, %v1356
      %1364 = vrot.lane.b32.xlu0 %v1358, 90
      %v1365 = vpop.permute.xlu0 %1364
      %1366 = vrot.lane.b32.xlu0 %v1359, 90
      %v1367 = vpop.permute.xlu0 %1366
      %1368 = vrot.lane.b32.xlu0 %v1360, 90
      %v1369 = vpop.permute.xlu0 %1368
      %vm1370 = vcmask 736256
      %v1371 = vsel %vm1370, %v1365, %v1367
      %v1372 = vsel %vm1370, %v1367, %v1369
      %v1377 = vadd.f32 %v1350, %v1365
      %v1378 = vadd.f32 %v1351, %v1371
      %v1379 = vadd.f32 %v1352, %v1372
      %v1380 = vadd.f32 %v1353, %v1369
      %1381 = vset.pattern.permute.xlu0 17
      %1382 = vperm.xlu0 %1381, %v255
      %v1383 = vpop.permute.xlu0 %1382
      %v1385 = vmul.f32 %v898, %v1383
      %v1386 = vmul.f32 %v902, %v1383
      %v1387 = vmul.f32 %v906, %v1383
      %1391 = vrot.lane.b32.xlu0 %v1385, 90
      %v1392 = vpop.permute.xlu0 %1391
      %1393 = vrot.lane.b32.xlu0 %v1386, 90
      %v1394 = vpop.permute.xlu0 %1393
      %1395 = vrot.lane.b32.xlu0 %v1387, 90
      %v1396 = vpop.permute.xlu0 %1395
      %v1397 = vsel %vm1370, %v1392, %v1394
      %v1398 = vsel %vm1370, %v1394, %v1396
      %v1403 = vadd.f32 %v1377, %v1392
      %v1404 = vadd.f32 %v1378, %v1397
      %v1405 = vadd.f32 %v1379, %v1398
      %v1406 = vadd.f32 %v1380, %v1396
      %1407 = vset.pattern.permute.xlu0 26
      %1408 = vperm.xlu0 %1407, %v255
      %v1409 = vpop.permute.xlu0 %1408
      %v1411 = vmul.f32 %v951, %v1409
      %v1412 = vmul.f32 %v955, %v1409
      %v1413 = vmul.f32 %v959, %v1409
      %1417 = vrot.lane.b32.xlu0 %v1411, 90
      %v1418 = vpop.permute.xlu0 %1417
      %1419 = vrot.lane.b32.xlu0 %v1412, 90
      %v1420 = vpop.permute.xlu0 %1419
      %1421 = vrot.lane.b32.xlu0 %v1413, 90
      %v1422 = vpop.permute.xlu0 %1421
      %v1423 = vsel %vm1370, %v1418, %v1420
      %v1424 = vsel %vm1370, %v1420, %v1422
      %v1429 = vadd.f32 %v1403, %v1418
      %v1430 = vadd.f32 %v1404, %v1423
      %v1431 = vadd.f32 %v1405, %v1424
      %v1432 = vadd.f32 %v1406, %v1422
      %1433 = vset.pattern.permute.xlu0 35
      %1434 = vperm.xlu0 %1433, %v255
      %v1435 = vpop.permute.xlu0 %1434
      %v1437 = vmul.f32 %v1004, %v1435
      %v1438 = vmul.f32 %v1008, %v1435
      %v1439 = vmul.f32 %v1012, %v1435
      %1443 = vrot.lane.b32.xlu0 %v1437, 90
      %v1444 = vpop.permute.xlu0 %1443
      %1445 = vrot.lane.b32.xlu0 %v1438, 90
      %v1446 = vpop.permute.xlu0 %1445
      %1447 = vrot.lane.b32.xlu0 %v1439, 90
      %v1448 = vpop.permute.xlu0 %1447
      %v1449 = vsel %vm1370, %v1444, %v1446
      %v1450 = vsel %vm1370, %v1446, %v1448
      %v1455 = vadd.f32 %v1429, %v1444
      %v1456 = vadd.f32 %v1430, %v1449
      %v1457 = vadd.f32 %v1431, %v1450
      %v1458 = vadd.f32 %v1432, %v1448
      %v1459 = vld [vmem:[%s3] sm:$0xf]
      %1461 = vset.pattern.permute.xlu0 0
      %1462 = vperm.xlu0 %1461, %v1459
      %v1463 = vpop.permute.xlu0 %1462
      %v1465 = vadd.f32 %v1455, %v1463
      %v1466 = vadd.f32 %v1456, %v1463
      %v1467 = vadd.f32 %v1457, %v1463
      %v1468 = vadd.f32 %v1458, %v1463
      %v1469 = vmax.f32 %v1465, 0.0
      %v1470 = vmax.f32 %v1466, 0.0
      %v1471 = vmax.f32 %v1467, 0.0
      %v1472 = vmax.f32 %v1468, 0.0
      %v1474 = vlaneseq
      %v1475 = vshrl.u32 %v1474, 7
      %v1476 = vsub.s32 0, %v1475
      %v1477 = vrot.slane %v252, %v1476
      %v1478 = vlaneseq
      %v1479 = vshrl.u32 %v1478, 7
      %v1480 = vsub.s32 1, %v1479
      %v1481 = vrot.slane %v252, %v1480
      %v1482 = vlaneseq
      %v1483 = vshrl.u32 %v1482, 7
      %v1484 = vsub.s32 2, %v1483
      %v1485 = vrot.slane %v252, %v1484
      %1486 = vrot.lane.b32.xlu0 %v1477, 109
      %v1487 = vpop.permute.xlu0 %1486
      %1488 = vrot.lane.b32.xlu0 %v1481, 109
      %v1489 = vpop.permute.xlu0 %1488
      %1490 = vrot.lane.b32.xlu0 %v1485, 109
      %v1491 = vpop.permute.xlu0 %1490
      %v1492 = vsel %vm869, %v1487, %v1489
      %v1493 = vsel %vm869, %v1489, %v1491
      %v1498 = vmul.f32 %v1469, %v1487
      %v1499 = vmul.f32 %v1470, %v1492
      %v1500 = vmul.f32 %v1471, %v1493
      %v1501 = vmul.f32 %v1472, %v1491
      %1502 = vst [vmem:[#allocation2] sm:$0xf] 0.0
      %vm1503 = vcmask 1044000
      %1504 = vst.msk [vmem:[#allocation2 + $0xc] sm:$0xf] %vm1503, 0.0
      %v1509 = vcombine.low %v1498, %v1499
      %v1510 = vcombine.low %v1500, %v1501
      %1511 = vrot.lane.b32.xlu0 %v1509, 19
      %v1512 = vpop.permute.xlu0 %1511
      %1513 = vrot.lane.b32.xlu0 %v1510, 19
      %v1514 = vpop.permute.xlu0 %1513
      %v1515 = vrot.slane %v1512, 4
      %v1516 = vrot.slane %v1514, 4
      %vm1517 = vcmask 1043456
      %v1518 = vsel %vm1517, %v1515, %v1516
      %vm1519 = vcmask 154624
      %v1520 = vsel %vm1519, %v1512, %v1518
      %v1521 = vsel %vm1519, %v1514, %v1516
      %1524 = vst [vmem:[#allocation2 + $0x4] sm:$0xff] %v1520
      %vm1525 = vcmask 551936
      %1526 = vst.msk [vmem:[#allocation2 + $0xc] sm:$0xf] %vm1525, %v1521
      %v1527 = vld [vmem:[%s246 + $0x4] sm:$0xff]
      %v1528 = vld [vmem:[%s246 + $0xc] sm:$0xf]
      %v1529 = vld [vmem:[#allocation2] sm:$0xff]
      %v1530 = vld [vmem:[#allocation2 + $0x8] sm:$0xff]
      %v1531 = vld [vmem:[%s4] sm:$0xf]
      %v1534 = vlaneseq
      %v1535 = vshrl.u32 %v1534, 7
      %v1536 = vsub.s32 0, %v1535
      %v1537 = vrot.slane %v1529, %v1536
      %v1538 = vlaneseq
      %v1539 = vshrl.u32 %v1538, 7
      %v1540 = vsub.s32 4, %v1539
      %v1541 = vrot.slane %v1529, %v1540
      %v1542 = vlaneseq
      %v1543 = vshrl.u32 %v1542, 7
      %v1544 = vsub.s32 0, %v1543
      %v1545 = vrot.slane %v1530, %v1544
      %v1546 = vlaneseq
      %v1547 = vshrl.u32 %v1546, 7
      %v1548 = vsub.s32 4, %v1547
      %v1549 = vrot.slane %v1530, %v1548
      %v1554 = vlaneseq
      %v1555 = vshrl.u32 %v1554, 7
      %v1556 = vsub.s32 0, %v1555
      %v1557 = vrot.slane %v1537, %v1556
      %v1558 = vlaneseq
      %v1559 = vshrl.u32 %v1558, 7
      %v1560 = vsub.s32 0, %v1559
      %v1561 = vrot.slane %v1541, %v1560
      %v1562 = vlaneseq
      %v1563 = vshrl.u32 %v1562, 7
      %v1564 = vsub.s32 0, %v1563
      %v1565 = vrot.slane %v1545, %v1564
      %v1566 = vlaneseq
      %v1567 = vshrl.u32 %v1566, 7
      %v1568 = vsub.s32 0, %v1567
      %v1569 = vrot.slane %v1549, %v1568
      %1571 = vset.pattern.permute.xlu0 0
      %1572 = vperm.xlu0 %1571, %v1531
      %v1573 = vpop.permute.xlu0 %1572
      %v1575 = vmul.f32 %v1557, %v1573
      %v1576 = vmul.f32 %v1561, %v1573
      %v1577 = vmul.f32 %v1565, %v1573
      %v1578 = vmul.f32 %v1569, %v1573
      %v1579 = vlaneseq
      %v1580 = vshrl.u32 %v1579, 7
      %v1581 = vsub.s32 1, %v1580
      %v1582 = vrot.slane %v1529, %v1581
      %v1583 = vlaneseq
      %v1584 = vshrl.u32 %v1583, 7
      %v1585 = vsub.s32 5, %v1584
      %v1586 = vrot.slane %v1529, %v1585
      %v1587 = vlaneseq
      %v1588 = vshrl.u32 %v1587, 7
      %v1589 = vsub.s32 1, %v1588
      %v1590 = vrot.slane %v1530, %v1589
      %v1591 = vlaneseq
      %v1592 = vshrl.u32 %v1591, 7
      %v1593 = vsub.s32 5, %v1592
      %v1594 = vrot.slane %v1530, %v1593
      %v1599 = vlaneseq
      %v1600 = vshrl.u32 %v1599, 7
      %v1601 = vsub.s32 1, %v1600
      %v1602 = vrot.slane %v1582, %v1601
      %v1603 = vlaneseq
      %v1604 = vshrl.u32 %v1603, 7
      %v1605 = vsub.s32 1, %v1604
      %v1606 = vrot.slane %v1586, %v1605
      %v1607 = vlaneseq
      %v1608 = vshrl.u32 %v1607, 7
      %v1609 = vsub.s32 1, %v1608
      %v1610 = vrot.slane %v1590, %v1609
      %v1611 = vlaneseq
      %v1612 = vshrl.u32 %v1611, 7
      %v1613 = vsub.s32 1, %v1612
      %v1614 = vrot.slane %v1594, %v1613
      %1615 = vset.pattern.permute.xlu0 9
      %1616 = vperm.xlu0 %1615, %v1531
      %v1617 = vpop.permute.xlu0 %1616
      %v1619 = vmul.f32 %v1602, %v1617
      %v1620 = vmul.f32 %v1606, %v1617
      %v1621 = vmul.f32 %v1610, %v1617
      %v1622 = vmul.f32 %v1614, %v1617
      %v1623 = vadd.f32 %v1575, %v1619
      %v1624 = vadd.f32 %v1576, %v1620
      %v1625 = vadd.f32 %v1577, %v1621
      %v1626 = vadd.f32 %v1578, %v1622
      %v1627 = vlaneseq
      %v1628 = vshrl.u32 %v1627, 7
      %v1629 = vsub.s32 2, %v1628
      %v1630 = vrot.slane %v1529, %v1629
      %v1631 = vlaneseq
      %v1632 = vshrl.u32 %v1631, 7
      %v1633 = vsub.s32 6, %v1632
      %v1634 = vrot.slane %v1529, %v1633
      %v1635 = vlaneseq
      %v1636 = vshrl.u32 %v1635, 7
      %v1637 = vsub.s32 2, %v1636
      %v1638 = vrot.slane %v1530, %v1637
      %v1639 = vlaneseq
      %v1640 = vshrl.u32 %v1639, 7
      %v1641 = vsub.s32 6, %v1640
      %v1642 = vrot.slane %v1530, %v1641
      %v1647 = vlaneseq
      %v1648 = vshrl.u32 %v1647, 7
      %v1649 = vsub.s32 2, %v1648
      %v1650 = vrot.slane %v1630, %v1649
      %v1651 = vlaneseq
      %v1652 = vshrl.u32 %v1651, 7
      %v1653 = vsub.s32 2, %v1652
      %v1654 = vrot.slane %v1634, %v1653
      %v1655 = vlaneseq
      %v1656 = vshrl.u32 %v1655, 7
      %v1657 = vsub.s32 2, %v1656
      %v1658 = vrot.slane %v1638, %v1657
      %v1659 = vlaneseq
      %v1660 = vshrl.u32 %v1659, 7
      %v1661 = vsub.s32 2, %v1660
      %v1662 = vrot.slane %v1642, %v1661
      %1663 = vset.pattern.permute.xlu0 18
      %1664 = vperm.xlu0 %1663, %v1531
      %v1665 = vpop.permute.xlu0 %1664
      %v1667 = vmul.f32 %v1650, %v1665
      %v1668 = vmul.f32 %v1654, %v1665
      %v1669 = vmul.f32 %v1658, %v1665
      %v1670 = vmul.f32 %v1662, %v1665
      %v1671 = vadd.f32 %v1623, %v1667
      %v1672 = vadd.f32 %v1624, %v1668
      %v1673 = vadd.f32 %v1625, %v1669
      %v1674 = vadd.f32 %v1626, %v1670
      %v1675 = vlaneseq
      %v1676 = vshrl.u32 %v1675, 7
      %v1677 = vsub.s32 3, %v1676
      %v1678 = vrot.slane %v1529, %v1677
      %v1679 = vlaneseq
      %v1680 = vshrl.u32 %v1679, 7
      %v1681 = vsub.s32 7, %v1680
      %v1682 = vrot.slane %v1529, %v1681
      %v1683 = vlaneseq
      %v1684 = vshrl.u32 %v1683, 7
      %v1685 = vsub.s32 3, %v1684
      %v1686 = vrot.slane %v1530, %v1685
      %v1687 = vlaneseq
      %v1688 = vshrl.u32 %v1687, 7
      %v1689 = vsub.s32 7, %v1688
      %v1690 = vrot.slane %v1530, %v1689
      %v1695 = vlaneseq
      %v1696 = vshrl.u32 %v1695, 7
      %v1697 = vsub.s32 3, %v1696
      %v1698 = vrot.slane %v1678, %v1697
      %v1699 = vlaneseq
      %v1700 = vshrl.u32 %v1699, 7
      %v1701 = vsub.s32 3, %v1700
      %v1702 = vrot.slane %v1682, %v1701
      %v1703 = vlaneseq
      %v1704 = vshrl.u32 %v1703, 7
      %v1705 = vsub.s32 3, %v1704
      %v1706 = vrot.slane %v1686, %v1705
      %v1707 = vlaneseq
      %v1708 = vshrl.u32 %v1707, 7
      %v1709 = vsub.s32 3, %v1708
      %v1710 = vrot.slane %v1690, %v1709
      %1711 = vset.pattern.permute.xlu0 27
      %1712 = vperm.xlu0 %1711, %v1531
      %v1713 = vpop.permute.xlu0 %1712
      %v1715 = vmul.f32 %v1698, %v1713
      %v1716 = vmul.f32 %v1702, %v1713
      %v1717 = vmul.f32 %v1706, %v1713
      %v1718 = vmul.f32 %v1710, %v1713
      %v1719 = vadd.f32 %v1671, %v1715
      %v1720 = vadd.f32 %v1672, %v1716
      %v1721 = vadd.f32 %v1673, %v1717
      %v1722 = vadd.f32 %v1674, %v1718
      %1723 = vset.pattern.permute.xlu0 1
      %1724 = vperm.xlu0 %1723, %v1531
      %v1725 = vpop.permute.xlu0 %1724
      %v1727 = vmul.f32 %v1557, %v1725
      %v1728 = vmul.f32 %v1561, %v1725
      %v1729 = vmul.f32 %v1565, %v1725
      %v1730 = vmul.f32 %v1569, %v1725
      %1735 = vrot.lane.b32.xlu0 %v1727, 127
      %v1736 = vpop.permute.xlu0 %1735
      %1737 = vrot.lane.b32.xlu0 %v1728, 127
      %v1738 = vpop.permute.xlu0 %1737
      %1739 = vrot.lane.b32.xlu0 %v1729, 127
      %v1740 = vpop.permute.xlu0 %1739
      %1741 = vrot.lane.b32.xlu0 %v1730, 127
      %v1742 = vpop.permute.xlu0 %1741
      %v1743 = vsel %vm467, %v1736, %v1738
      %v1744 = vsel %vm467, %v1738, %v1740
      %v1745 = vsel %vm467, %v1740, %v1742
      %v1750 = vadd.f32 %v1719, %v1743
      %v1751 = vadd.f32 %v1720, %v1744
      %v1752 = vadd.f32 %v1721, %v1745
      %v1753 = vadd.f32 %v1722, %v1742
      %1754 = vset.pattern.permute.xlu0 10
      %1755 = vperm.xlu0 %1754, %v1531
      %v1756 = vpop.permute.xlu0 %1755
      %v1758 = vmul.f32 %v1602, %v1756
      %v1759 = vmul.f32 %v1606, %v1756
      %v1760 = vmul.f32 %v1610, %v1756
      %v1761 = vmul.f32 %v1614, %v1756
      %1766 = vrot.lane.b32.xlu0 %v1758, 127
      %v1767 = vpop.permute.xlu0 %1766
      %1768 = vrot.lane.b32.xlu0 %v1759, 127
      %v1769 = vpop.permute.xlu0 %1768
      %1770 = vrot.lane.b32.xlu0 %v1760, 127
      %v1771 = vpop.permute.xlu0 %1770
      %1772 = vrot.lane.b32.xlu0 %v1761, 127
      %v1773 = vpop.permute.xlu0 %1772
      %v1774 = vsel %vm467, %v1767, %v1769
      %v1775 = vsel %vm467, %v1769, %v1771
      %v1776 = vsel %vm467, %v1771, %v1773
      %v1781 = vadd.f32 %v1750, %v1774
      %v1782 = vadd.f32 %v1751, %v1775
      %v1783 = vadd.f32 %v1752, %v1776
      %v1784 = vadd.f32 %v1753, %v1773
      %1785 = vset.pattern.permute.xlu0 19
      %1786 = vperm.xlu0 %1785, %v1531
      %v1787 = vpop.permute.xlu0 %1786
      %v1789 = vmul.f32 %v1650, %v1787
      %v1790 = vmul.f32 %v1654, %v1787
      %v1791 = vmul.f32 %v1658, %v1787
      %v1792 = vmul.f32 %v1662, %v1787
      %1797 = vrot.lane.b32.xlu0 %v1789, 127
      %v1798 = vpop.permute.xlu0 %1797
      %1799 = vrot.lane.b32.xlu0 %v1790, 127
      %v1800 = vpop.permute.xlu0 %1799
      %1801 = vrot.lane.b32.xlu0 %v1791, 127
      %v1802 = vpop.permute.xlu0 %1801
      %1803 = vrot.lane.b32.xlu0 %v1792, 127
      %v1804 = vpop.permute.xlu0 %1803
      %v1805 = vsel %vm467, %v1798, %v1800
      %v1806 = vsel %vm467, %v1800, %v1802
      %v1807 = vsel %vm467, %v1802, %v1804
      %v1812 = vadd.f32 %v1781, %v1805
      %v1813 = vadd.f32 %v1782, %v1806
      %v1814 = vadd.f32 %v1783, %v1807
      %v1815 = vadd.f32 %v1784, %v1804
      %1816 = vset.pattern.permute.xlu0 28
      %1817 = vperm.xlu0 %1816, %v1531
      %v1818 = vpop.permute.xlu0 %1817
      %v1820 = vmul.f32 %v1698, %v1818
      %v1821 = vmul.f32 %v1702, %v1818
      %v1822 = vmul.f32 %v1706, %v1818
      %v1823 = vmul.f32 %v1710, %v1818
      %1828 = vrot.lane.b32.xlu0 %v1820, 127
      %v1829 = vpop.permute.xlu0 %1828
      %1830 = vrot.lane.b32.xlu0 %v1821, 127
      %v1831 = vpop.permute.xlu0 %1830
      %1832 = vrot.lane.b32.xlu0 %v1822, 127
      %v1833 = vpop.permute.xlu0 %1832
      %1834 = vrot.lane.b32.xlu0 %v1823, 127
      %v1835 = vpop.permute.xlu0 %1834
      %v1836 = vsel %vm467, %v1829, %v1831
      %v1837 = vsel %vm467, %v1831, %v1833
      %v1838 = vsel %vm467, %v1833, %v1835
      %v1843 = vadd.f32 %v1812, %v1836
      %v1844 = vadd.f32 %v1813, %v1837
      %v1845 = vadd.f32 %v1814, %v1838
      %v1846 = vadd.f32 %v1815, %v1835
      %1847 = vset.pattern.permute.xlu0 2
      %1848 = vperm.xlu0 %1847, %v1531
      %v1849 = vpop.permute.xlu0 %1848
      %v1851 = vmul.f32 %v1557, %v1849
      %v1852 = vmul.f32 %v1561, %v1849
      %v1853 = vmul.f32 %v1565, %v1849
      %v1854 = vmul.f32 %v1569, %v1849
      %1859 = vrot.lane.b32.xlu0 %v1851, 126
      %v1860 = vpop.permute.xlu0 %1859
      %1861 = vrot.lane.b32.xlu0 %v1852, 126
      %v1862 = vpop.permute.xlu0 %1861
      %1863 = vrot.lane.b32.xlu0 %v1853, 126
      %v1864 = vpop.permute.xlu0 %1863
      %1865 = vrot.lane.b32.xlu0 %v1854, 126
      %v1866 = vpop.permute.xlu0 %1865
      %v1867 = vsel %vm592, %v1860, %v1862
      %v1868 = vsel %vm592, %v1862, %v1864
      %v1869 = vsel %vm592, %v1864, %v1866
      %v1874 = vadd.f32 %v1843, %v1867
      %v1875 = vadd.f32 %v1844, %v1868
      %v1876 = vadd.f32 %v1845, %v1869
      %v1877 = vadd.f32 %v1846, %v1866
      %1878 = vset.pattern.permute.xlu0 11
      %1879 = vperm.xlu0 %1878, %v1531
      %v1880 = vpop.permute.xlu0 %1879
      %v1882 = vmul.f32 %v1602, %v1880
      %v1883 = vmul.f32 %v1606, %v1880
      %v1884 = vmul.f32 %v1610, %v1880
      %v1885 = vmul.f32 %v1614, %v1880
      %1890 = vrot.lane.b32.xlu0 %v1882, 126
      %v1891 = vpop.permute.xlu0 %1890
      %1892 = vrot.lane.b32.xlu0 %v1883, 126
      %v1893 = vpop.permute.xlu0 %1892
      %1894 = vrot.lane.b32.xlu0 %v1884, 126
      %v1895 = vpop.permute.xlu0 %1894
      %1896 = vrot.lane.b32.xlu0 %v1885, 126
      %v1897 = vpop.permute.xlu0 %1896
      %v1898 = vsel %vm592, %v1891, %v1893
      %v1899 = vsel %vm592, %v1893, %v1895
      %v1900 = vsel %vm592, %v1895, %v1897
      %v1905 = vadd.f32 %v1874, %v1898
      %v1906 = vadd.f32 %v1875, %v1899
      %v1907 = vadd.f32 %v1876, %v1900
      %v1908 = vadd.f32 %v1877, %v1897
      %1909 = vset.pattern.permute.xlu0 20
      %1910 = vperm.xlu0 %1909, %v1531
      %v1911 = vpop.permute.xlu0 %1910
      %v1913 = vmul.f32 %v1650, %v1911
      %v1914 = vmul.f32 %v1654, %v1911
      %v1915 = vmul.f32 %v1658, %v1911
      %v1916 = vmul.f32 %v1662, %v1911
      %1921 = vrot.lane.b32.xlu0 %v1913, 126
      %v1922 = vpop.permute.xlu0 %1921
      %1923 = vrot.lane.b32.xlu0 %v1914, 126
      %v1924 = vpop.permute.xlu0 %1923
      %1925 = vrot.lane.b32.xlu0 %v1915, 126
      %v1926 = vpop.permute.xlu0 %1925
      %1927 = vrot.lane.b32.xlu0 %v1916, 126
      %v1928 = vpop.permute.xlu0 %1927
      %v1929 = vsel %vm592, %v1922, %v1924
      %v1930 = vsel %vm592, %v1924, %v1926
      %v1931 = vsel %vm592, %v1926, %v1928
      %v1936 = vadd.f32 %v1905, %v1929
      %v1937 = vadd.f32 %v1906, %v1930
      %v1938 = vadd.f32 %v1907, %v1931
      %v1939 = vadd.f32 %v1908, %v1928
      %1940 = vset.pattern.permute.xlu0 29
      %1941 = vperm.xlu0 %1940, %v1531
      %v1942 = vpop.permute.xlu0 %1941
      %v1944 = vmul.f32 %v1698, %v1942
      %v1945 = vmul.f32 %v1702, %v1942
      %v1946 = vmul.f32 %v1706, %v1942
      %v1947 = vmul.f32 %v1710, %v1942
      %1952 = vrot.lane.b32.xlu0 %v1944, 126
      %v1953 = vpop.permute.xlu0 %1952
      %1954 = vrot.lane.b32.xlu0 %v1945, 126
      %v1955 = vpop.permute.xlu0 %1954
      %1956 = vrot.lane.b32.xlu0 %v1946, 126
      %v1957 = vpop.permute.xlu0 %1956
      %1958 = vrot.lane.b32.xlu0 %v1947, 126
      %v1959 = vpop.permute.xlu0 %1958
      %v1960 = vsel %vm592, %v1953, %v1955
      %v1961 = vsel %vm592, %v1955, %v1957
      %v1962 = vsel %vm592, %v1957, %v1959
      %v1967 = vadd.f32 %v1936, %v1960
      %v1968 = vadd.f32 %v1937, %v1961
      %v1969 = vadd.f32 %v1938, %v1962
      %v1970 = vadd.f32 %v1939, %v1959
      %1971 = vset.pattern.permute.xlu0 3
      %1972 = vperm.xlu0 %1971, %v1531
      %v1973 = vpop.permute.xlu0 %1972
      %v1975 = vmul.f32 %v1557, %v1973
      %v1976 = vmul.f32 %v1561, %v1973
      %v1977 = vmul.f32 %v1565, %v1973
      %v1978 = vmul.f32 %v1569, %v1973
      %1983 = vrot.lane.b32.xlu0 %v1975, 110
      %v1984 = vpop.permute.xlu0 %1983
      %1985 = vrot.lane.b32.xlu0 %v1976, 110
      %v1986 = vpop.permute.xlu0 %1985
      %1987 = vrot.lane.b32.xlu0 %v1977, 110
      %v1988 = vpop.permute.xlu0 %1987
      %1989 = vrot.lane.b32.xlu0 %v1978, 110
      %v1990 = vpop.permute.xlu0 %1989
      %v1991 = vsel %vm717, %v1984, %v1986
      %v1992 = vsel %vm717, %v1986, %v1988
      %v1993 = vsel %vm717, %v1988, %v1990
      %v1998 = vadd.f32 %v1967, %v1991
      %v1999 = vadd.f32 %v1968, %v1992
      %v2000 = vadd.f32 %v1969, %v1993
      %v2001 = vadd.f32 %v1970, %v1990
      %2002 = vset.pattern.permute.xlu0 12
      %2003 = vperm.xlu0 %2002, %v1531
      %v2004 = vpop.permute.xlu0 %2003
      %v2006 = vmul.f32 %v1602, %v2004
      %v2007 = vmul.f32 %v1606, %v2004
      %v2008 = vmul.f32 %v1610, %v2004
      %v2009 = vmul.f32 %v1614, %v2004
      %2014 = vrot.lane.b32.xlu0 %v2006, 110
      %v2015 = vpop.permute.xlu0 %2014
      %2016 = vrot.lane.b32.xlu0 %v2007, 110
      %v2017 = vpop.permute.xlu0 %2016
      %2018 = vrot.lane.b32.xlu0 %v2008, 110
      %v2019 = vpop.permute.xlu0 %2018
      %2020 = vrot.lane.b32.xlu0 %v2009, 110
      %v2021 = vpop.permute.xlu0 %2020
      %v2022 = vsel %vm717, %v2015, %v2017
      %v2023 = vsel %vm717, %v2017, %v2019
      %v2024 = vsel %vm717, %v2019, %v2021
      %v2029 = vadd.f32 %v1998, %v2022
      %v2030 = vadd.f32 %v1999, %v2023
      %v2031 = vadd.f32 %v2000, %v2024
      %v2032 = vadd.f32 %v2001, %v2021
      %2033 = vset.pattern.permute.xlu0 21
      %2034 = vperm.xlu0 %2033, %v1531
      %v2035 = vpop.permute.xlu0 %2034
      %v2037 = vmul.f32 %v1650, %v2035
      %v2038 = vmul.f32 %v1654, %v2035
      %v2039 = vmul.f32 %v1658, %v2035
      %v2040 = vmul.f32 %v1662, %v2035
      %2045 = vrot.lane.b32.xlu0 %v2037, 110
      %v2046 = vpop.permute.xlu0 %2045
      %2047 = vrot.lane.b32.xlu0 %v2038, 110
      %v2048 = vpop.permute.xlu0 %2047
      %2049 = vrot.lane.b32.xlu0 %v2039, 110
      %v2050 = vpop.permute.xlu0 %2049
      %2051 = vrot.lane.b32.xlu0 %v2040, 110
      %v2052 = vpop.permute.xlu0 %2051
      %v2053 = vsel %vm717, %v2046, %v2048
      %v2054 = vsel %vm717, %v2048, %v2050
      %v2055 = vsel %vm717, %v2050, %v2052
      %v2060 = vadd.f32 %v2029, %v2053
      %v2061 = vadd.f32 %v2030, %v2054
      %v2062 = vadd.f32 %v2031, %v2055
      %v2063 = vadd.f32 %v2032, %v2052
      %2064 = vset.pattern.permute.xlu0 30
      %2065 = vperm.xlu0 %2064, %v1531
      %v2066 = vpop.permute.xlu0 %2065
      %v2068 = vmul.f32 %v1698, %v2066
      %v2069 = vmul.f32 %v1702, %v2066
      %v2070 = vmul.f32 %v1706, %v2066
      %v2071 = vmul.f32 %v1710, %v2066
      %2076 = vrot.lane.b32.xlu0 %v2068, 110
      %v2077 = vpop.permute.xlu0 %2076
      %2078 = vrot.lane.b32.xlu0 %v2069, 110
      %v2079 = vpop.permute.xlu0 %2078
      %2080 = vrot.lane.b32.xlu0 %v2070, 110
      %v2081 = vpop.permute.xlu0 %2080
      %2082 = vrot.lane.b32.xlu0 %v2071, 110
      %v2083 = vpop.permute.xlu0 %2082
      %v2084 = vsel %vm717, %v2077, %v2079
      %v2085 = vsel %vm717, %v2079, %v2081
      %v2086 = vsel %vm717, %v2081, %v2083
      %v2091 = vadd.f32 %v2060, %v2084
      %v2092 = vadd.f32 %v2061, %v2085
      %v2093 = vadd.f32 %v2062, %v2086
      %v2094 = vadd.f32 %v2063, %v2083
      %v2095 = vld [vmem:[#allocation2 + $0x4] sm:$0xff]
      %v2096 = vld [vmem:[#allocation2 + $0xc] sm:$0xf]
      %v2099 = vlaneseq
      %v2100 = vshrl.u32 %v2099, 7
      %v2101 = vsub.s32 0, %v2100
      %v2102 = vrot.slane %v2095, %v2101
      %v2103 = vlaneseq
      %v2104 = vshrl.u32 %v2103, 7
      %v2105 = vsub.s32 4, %v2104
      %v2106 = vrot.slane %v2095, %v2105
      %v2107 = vlaneseq
      %v2108 = vshrl.u32 %v2107, 7
      %v2109 = vsub.s32 0, %v2108
      %v2110 = vrot.slane %v2096, %v2109
      %v2114 = vlaneseq
      %v2115 = vshrl.u32 %v2114, 7
      %v2116 = vsub.s32 0, %v2115
      %v2117 = vrot.slane %v2102, %v2116
      %v2118 = vlaneseq
      %v2119 = vshrl.u32 %v2118, 7
      %v2120 = vsub.s32 0, %v2119
      %v2121 = vrot.slane %v2106, %v2120
      %v2122 = vlaneseq
      %v2123 = vshrl.u32 %v2122, 7
      %v2124 = vsub.s32 0, %v2123
      %v2125 = vrot.slane %v2110, %v2124
      %2126 = vset.pattern.permute.xlu0 4
      %2127 = vperm.xlu0 %2126, %v1531
      %v2128 = vpop.permute.xlu0 %2127
      %v2130 = vmul.f32 %v2117, %v2128
      %v2131 = vmul.f32 %v2121, %v2128
      %v2132 = vmul.f32 %v2125, %v2128
      %2136 = vrot.lane.b32.xlu0 %v2130, 109
      %v2137 = vpop.permute.xlu0 %2136
      %2138 = vrot.lane.b32.xlu0 %v2131, 109
      %v2139 = vpop.permute.xlu0 %2138
      %2140 = vrot.lane.b32.xlu0 %v2132, 109
      %v2141 = vpop.permute.xlu0 %2140
      %v2142 = vsel %vm869, %v2137, %v2139
      %v2143 = vsel %vm869, %v2139, %v2141
      %v2148 = vadd.f32 %v2091, %v2137
      %v2149 = vadd.f32 %v2092, %v2142
      %v2150 = vadd.f32 %v2093, %v2143
      %v2151 = vadd.f32 %v2094, %v2141
      %v2152 = vlaneseq
      %v2153 = vshrl.u32 %v2152, 7
      %v2154 = vsub.s32 1, %v2153
      %v2155 = vrot.slane %v2095, %v2154
      %v2156 = vlaneseq
      %v2157 = vshrl.u32 %v2156, 7
      %v2158 = vsub.s32 5, %v2157
      %v2159 = vrot.slane %v2095, %v2158
      %v2160 = vlaneseq
      %v2161 = vshrl.u32 %v2160, 7
      %v2162 = vsub.s32 1, %v2161
      %v2163 = vrot.slane %v2096, %v2162
      %v2167 = vlaneseq
      %v2168 = vshrl.u32 %v2167, 7
      %v2169 = vsub.s32 1, %v2168
      %v2170 = vrot.slane %v2155, %v2169
      %v2171 = vlaneseq
      %v2172 = vshrl.u32 %v2171, 7
      %v2173 = vsub.s32 1, %v2172
      %v2174 = vrot.slane %v2159, %v2173
      %v2175 = vlaneseq
      %v2176 = vshrl.u32 %v2175, 7
      %v2177 = vsub.s32 1, %v2176
      %v2178 = vrot.slane %v2163, %v2177
      %2179 = vset.pattern.permute.xlu0 13
      %2180 = vperm.xlu0 %2179, %v1531
      %v2181 = vpop.permute.xlu0 %2180
      %v2183 = vmul.f32 %v2170, %v2181
      %v2184 = vmul.f32 %v2174, %v2181
      %v2185 = vmul.f32 %v2178, %v2181
      %2189 = vrot.lane.b32.xlu0 %v2183, 109
      %v2190 = vpop.permute.xlu0 %2189
      %2191 = vrot.lane.b32.xlu0 %v2184, 109
      %v2192 = vpop.permute.xlu0 %2191
      %2193 = vrot.lane.b32.xlu0 %v2185, 109
      %v2194 = vpop.permute.xlu0 %2193
      %v2195 = vsel %vm869, %v2190, %v2192
      %v2196 = vsel %vm869, %v2192, %v2194
      %v2201 = vadd.f32 %v2148, %v2190
      %v2202 = vadd.f32 %v2149, %v2195
      %v2203 = vadd.f32 %v2150, %v2196
      %v2204 = vadd.f32 %v2151, %v2194
      %v2205 = vlaneseq
      %v2206 = vshrl.u32 %v2205, 7
      %v2207 = vsub.s32 2, %v2206
      %v2208 = vrot.slane %v2095, %v2207
      %v2209 = vlaneseq
      %v2210 = vshrl.u32 %v2209, 7
      %v2211 = vsub.s32 6, %v2210
      %v2212 = vrot.slane %v2095, %v2211
      %v2213 = vlaneseq
      %v2214 = vshrl.u32 %v2213, 7
      %v2215 = vsub.s32 2, %v2214
      %v2216 = vrot.slane %v2096, %v2215
      %v2220 = vlaneseq
      %v2221 = vshrl.u32 %v2220, 7
      %v2222 = vsub.s32 2, %v2221
      %v2223 = vrot.slane %v2208, %v2222
      %v2224 = vlaneseq
      %v2225 = vshrl.u32 %v2224, 7
      %v2226 = vsub.s32 2, %v2225
      %v2227 = vrot.slane %v2212, %v2226
      %v2228 = vlaneseq
      %v2229 = vshrl.u32 %v2228, 7
      %v2230 = vsub.s32 2, %v2229
      %v2231 = vrot.slane %v2216, %v2230
      %2232 = vset.pattern.permute.xlu0 22
      %2233 = vperm.xlu0 %2232, %v1531
      %v2234 = vpop.permute.xlu0 %2233
      %v2236 = vmul.f32 %v2223, %v2234
      %v2237 = vmul.f32 %v2227, %v2234
      %v2238 = vmul.f32 %v2231, %v2234
      %2242 = vrot.lane.b32.xlu0 %v2236, 109
      %v2243 = vpop.permute.xlu0 %2242
      %2244 = vrot.lane.b32.xlu0 %v2237, 109
      %v2245 = vpop.permute.xlu0 %2244
      %2246 = vrot.lane.b32.xlu0 %v2238, 109
      %v2247 = vpop.permute.xlu0 %2246
      %v2248 = vsel %vm869, %v2243, %v2245
      %v2249 = vsel %vm869, %v2245, %v2247
      %v2254 = vadd.f32 %v2201, %v2243
      %v2255 = vadd.f32 %v2202, %v2248
      %v2256 = vadd.f32 %v2203, %v2249
      %v2257 = vadd.f32 %v2204, %v2247
      %v2258 = vlaneseq
      %v2259 = vshrl.u32 %v2258, 7
      %v2260 = vsub.s32 3, %v2259
      %v2261 = vrot.slane %v2095, %v2260
      %v2262 = vlaneseq
      %v2263 = vshrl.u32 %v2262, 7
      %v2264 = vsub.s32 7, %v2263
      %v2265 = vrot.slane %v2095, %v2264
      %v2266 = vlaneseq
      %v2267 = vshrl.u32 %v2266, 7
      %v2268 = vsub.s32 3, %v2267
      %v2269 = vrot.slane %v2096, %v2268
      %v2273 = vlaneseq
      %v2274 = vshrl.u32 %v2273, 7
      %v2275 = vsub.s32 3, %v2274
      %v2276 = vrot.slane %v2261, %v2275
      %v2277 = vlaneseq
      %v2278 = vshrl.u32 %v2277, 7
      %v2279 = vsub.s32 3, %v2278
      %v2280 = vrot.slane %v2265, %v2279
      %v2281 = vlaneseq
      %v2282 = vshrl.u32 %v2281, 7
      %v2283 = vsub.s32 3, %v2282
      %v2284 = vrot.slane %v2269, %v2283
      %2285 = vset.pattern.permute.xlu0 31
      %2286 = vperm.xlu0 %2285, %v1531
      %v2287 = vpop.permute.xlu0 %2286
      %v2289 = vmul.f32 %v2276, %v2287
      %v2290 = vmul.f32 %v2280, %v2287
      %v2291 = vmul.f32 %v2284, %v2287
      %2295 = vrot.lane.b32.xlu0 %v2289, 109
      %v2296 = vpop.permute.xlu0 %2295
      %2297 = vrot.lane.b32.xlu0 %v2290, 109
      %v2298 = vpop.permute.xlu0 %2297
      %2299 = vrot.lane.b32.xlu0 %v2291, 109
      %v2300 = vpop.permute.xlu0 %2299
      %v2301 = vsel %vm869, %v2296, %v2298
      %v2302 = vsel %vm869, %v2298, %v2300
      %v2307 = vadd.f32 %v2254, %v2296
      %v2308 = vadd.f32 %v2255, %v2301
      %v2309 = vadd.f32 %v2256, %v2302
      %v2310 = vadd.f32 %v2257, %v2300
      %2311 = vset.pattern.permute.xlu0 5
      %2312 = vperm.xlu0 %2311, %v1531
      %v2313 = vpop.permute.xlu0 %2312
      %v2315 = vmul.f32 %v2117, %v2313
      %v2316 = vmul.f32 %v2121, %v2313
      %v2317 = vmul.f32 %v2125, %v2313
      %2321 = vrot.lane.b32.xlu0 %v2315, 108
      %v2322 = vpop.permute.xlu0 %2321
      %2323 = vrot.lane.b32.xlu0 %v2316, 108
      %v2324 = vpop.permute.xlu0 %2323
      %2325 = vrot.lane.b32.xlu0 %v2317, 108
      %v2326 = vpop.permute.xlu0 %2325
      %v2327 = vsel %vm1055, %v2322, %v2324
      %v2328 = vsel %vm1055, %v2324, %v2326
      %v2333 = vadd.f32 %v2307, %v2322
      %v2334 = vadd.f32 %v2308, %v2327
      %v2335 = vadd.f32 %v2309, %v2328
      %v2336 = vadd.f32 %v2310, %v2326
      %2337 = vset.pattern.permute.xlu0 14
      %2338 = vperm.xlu0 %2337, %v1531
      %v2339 = vpop.permute.xlu0 %2338
      %v2341 = vmul.f32 %v2170, %v2339
      %v2342 = vmul.f32 %v2174, %v2339
      %v2343 = vmul.f32 %v2178, %v2339
      %2347 = vrot.lane.b32.xlu0 %v2341, 108
      %v2348 = vpop.permute.xlu0 %2347
      %2349 = vrot.lane.b32.xlu0 %v2342, 108
      %v2350 = vpop.permute.xlu0 %2349
      %2351 = vrot.lane.b32.xlu0 %v2343, 108
      %v2352 = vpop.permute.xlu0 %2351
      %v2353 = vsel %vm1055, %v2348, %v2350
      %v2354 = vsel %vm1055, %v2350, %v2352
      %v2359 = vadd.f32 %v2333, %v2348
      %v2360 = vadd.f32 %v2334, %v2353
      %v2361 = vadd.f32 %v2335, %v2354
      %v2362 = vadd.f32 %v2336, %v2352
      %2363 = vset.pattern.permute.xlu0 23
      %2364 = vperm.xlu0 %2363, %v1531
      %v2365 = vpop.permute.xlu0 %2364
      %v2367 = vmul.f32 %v2223, %v2365
      %v2368 = vmul.f32 %v2227, %v2365
      %v2369 = vmul.f32 %v2231, %v2365
      %2373 = vrot.lane.b32.xlu0 %v2367, 108
      %v2374 = vpop.permute.xlu0 %2373
      %2375 = vrot.lane.b32.xlu0 %v2368, 108
      %v2376 = vpop.permute.xlu0 %2375
      %2377 = vrot.lane.b32.xlu0 %v2369, 108
      %v2378 = vpop.permute.xlu0 %2377
      %v2379 = vsel %vm1055, %v2374, %v2376
      %v2380 = vsel %vm1055, %v2376, %v2378
      %v2385 = vadd.f32 %v2359, %v2374
      %v2386 = vadd.f32 %v2360, %v2379
      %v2387 = vadd.f32 %v2361, %v2380
      %v2388 = vadd.f32 %v2362, %v2378
      %2389 = vset.pattern.permute.xlu0 32
      %2390 = vperm.xlu0 %2389, %v1531
      %v2391 = vpop.permute.xlu0 %2390
      %v2393 = vmul.f32 %v2276, %v2391
      %v2394 = vmul.f32 %v2280, %v2391
      %v2395 = vmul.f32 %v2284, %v2391
      %2399 = vrot.lane.b32.xlu0 %v2393, 108
      %v2400 = vpop.permute.xlu0 %2399
      %2401 = vrot.lane.b32.xlu0 %v2394, 108
      %v2402 = vpop.permute.xlu0 %2401
      %2403 = vrot.lane.b32.xlu0 %v2395, 108
      %v2404 = vpop.permute.xlu0 %2403
      %v2405 = vsel %vm1055, %v2400, %v2402
      %v2406 = vsel %vm1055, %v2402, %v2404
      %v2411 = vadd.f32 %v2385, %v2400
      %v2412 = vadd.f32 %v2386, %v2405
      %v2413 = vadd.f32 %v2387, %v2406
      %v2414 = vadd.f32 %v2388, %v2404
      %2415 = vset.pattern.permute.xlu0 6
      %2416 = vperm.xlu0 %2415, %v1531
      %v2417 = vpop.permute.xlu0 %2416
      %v2419 = vmul.f32 %v2117, %v2417
      %v2420 = vmul.f32 %v2121, %v2417
      %v2421 = vmul.f32 %v2125, %v2417
      %2425 = vrot.lane.b32.xlu0 %v2419, 92
      %v2426 = vpop.permute.xlu0 %2425
      %2427 = vrot.lane.b32.xlu0 %v2420, 92
      %v2428 = vpop.permute.xlu0 %2427
      %2429 = vrot.lane.b32.xlu0 %v2421, 92
      %v2430 = vpop.permute.xlu0 %2429
      %v2431 = vsel %vm1160, %v2426, %v2428
      %v2432 = vsel %vm1160, %v2428, %v2430
      %v2437 = vadd.f32 %v2411, %v2426
      %v2438 = vadd.f32 %v2412, %v2431
      %v2439 = vadd.f32 %v2413, %v2432
      %v2440 = vadd.f32 %v2414, %v2430
      %2441 = vset.pattern.permute.xlu0 15
      %2442 = vperm.xlu0 %2441, %v1531
      %v2443 = vpop.permute.xlu0 %2442
      %v2445 = vmul.f32 %v2170, %v2443
      %v2446 = vmul.f32 %v2174, %v2443
      %v2447 = vmul.f32 %v2178, %v2443
      %2451 = vrot.lane.b32.xlu0 %v2445, 92
      %v2452 = vpop.permute.xlu0 %2451
      %2453 = vrot.lane.b32.xlu0 %v2446, 92
      %v2454 = vpop.permute.xlu0 %2453
      %2455 = vrot.lane.b32.xlu0 %v2447, 92
      %v2456 = vpop.permute.xlu0 %2455
      %v2457 = vsel %vm1160, %v2452, %v2454
      %v2458 = vsel %vm1160, %v2454, %v2456
      %v2463 = vadd.f32 %v2437, %v2452
      %v2464 = vadd.f32 %v2438, %v2457
      %v2465 = vadd.f32 %v2439, %v2458
      %v2466 = vadd.f32 %v2440, %v2456
      %2467 = vset.pattern.permute.xlu0 24
      %2468 = vperm.xlu0 %2467, %v1531
      %v2469 = vpop.permute.xlu0 %2468
      %v2471 = vmul.f32 %v2223, %v2469
      %v2472 = vmul.f32 %v2227, %v2469
      %v2473 = vmul.f32 %v2231, %v2469
      %2477 = vrot.lane.b32.xlu0 %v2471, 92
      %v2478 = vpop.permute.xlu0 %2477
      %2479 = vrot.lane.b32.xlu0 %v2472, 92
      %v2480 = vpop.permute.xlu0 %2479
      %2481 = vrot.lane.b32.xlu0 %v2473, 92
      %v2482 = vpop.permute.xlu0 %2481
      %v2483 = vsel %vm1160, %v2478, %v2480
      %v2484 = vsel %vm1160, %v2480, %v2482
      %v2489 = vadd.f32 %v2463, %v2478
      %v2490 = vadd.f32 %v2464, %v2483
      %v2491 = vadd.f32 %v2465, %v2484
      %v2492 = vadd.f32 %v2466, %v2482
      %2493 = vset.pattern.permute.xlu0 33
      %2494 = vperm.xlu0 %2493, %v1531
      %v2495 = vpop.permute.xlu0 %2494
      %v2497 = vmul.f32 %v2276, %v2495
      %v2498 = vmul.f32 %v2280, %v2495
      %v2499 = vmul.f32 %v2284, %v2495
      %2503 = vrot.lane.b32.xlu0 %v2497, 92
      %v2504 = vpop.permute.xlu0 %2503
      %2505 = vrot.lane.b32.xlu0 %v2498, 92
      %v2506 = vpop.permute.xlu0 %2505
      %2507 = vrot.lane.b32.xlu0 %v2499, 92
      %v2508 = vpop.permute.xlu0 %2507
      %v2509 = vsel %vm1160, %v2504, %v2506
      %v2510 = vsel %vm1160, %v2506, %v2508
      %v2515 = vadd.f32 %v2489, %v2504
      %v2516 = vadd.f32 %v2490, %v2509
      %v2517 = vadd.f32 %v2491, %v2510
      %v2518 = vadd.f32 %v2492, %v2508
      %2519 = vset.pattern.permute.xlu0 7
      %2520 = vperm.xlu0 %2519, %v1531
      %v2521 = vpop.permute.xlu0 %2520
      %v2523 = vmul.f32 %v2117, %v2521
      %v2524 = vmul.f32 %v2121, %v2521
      %v2525 = vmul.f32 %v2125, %v2521
      %2529 = vrot.lane.b32.xlu0 %v2523, 91
      %v2530 = vpop.permute.xlu0 %2529
      %2531 = vrot.lane.b32.xlu0 %v2524, 91
      %v2532 = vpop.permute.xlu0 %2531
      %2533 = vrot.lane.b32.xlu0 %v2525, 91
      %v2534 = vpop.permute.xlu0 %2533
      %v2535 = vsel %vm1265, %v2530, %v2532
      %v2536 = vsel %vm1265, %v2532, %v2534
      %v2541 = vadd.f32 %v2515, %v2530
      %v2542 = vadd.f32 %v2516, %v2535
      %v2543 = vadd.f32 %v2517, %v2536
      %v2544 = vadd.f32 %v2518, %v2534
      %2545 = vset.pattern.permute.xlu0 16
      %2546 = vperm.xlu0 %2545, %v1531
      %v2547 = vpop.permute.xlu0 %2546
      %v2549 = vmul.f32 %v2170, %v2547
      %v2550 = vmul.f32 %v2174, %v2547
      %v2551 = vmul.f32 %v2178, %v2547
      %2555 = vrot.lane.b32.xlu0 %v2549, 91
      %v2556 = vpop.permute.xlu0 %2555
      %2557 = vrot.lane.b32.xlu0 %v2550, 91
      %v2558 = vpop.permute.xlu0 %2557
      %2559 = vrot.lane.b32.xlu0 %v2551, 91
      %v2560 = vpop.permute.xlu0 %2559
      %v2561 = vsel %vm1265, %v2556, %v2558
      %v2562 = vsel %vm1265, %v2558, %v2560
      %v2567 = vadd.f32 %v2541, %v2556
      %v2568 = vadd.f32 %v2542, %v2561
      %v2569 = vadd.f32 %v2543, %v2562
      %v2570 = vadd.f32 %v2544, %v2560
      %2571 = vset.pattern.permute.xlu0 25
      %2572 = vperm.xlu0 %2571, %v1531
      %v2573 = vpop.permute.xlu0 %2572
      %v2575 = vmul.f32 %v2223, %v2573
      %v2576 = vmul.f32 %v2227, %v2573
      %v2577 = vmul.f32 %v2231, %v2573
      %2581 = vrot.lane.b32.xlu0 %v2575, 91
      %v2582 = vpop.permute.xlu0 %2581
      %2583 = vrot.lane.b32.xlu0 %v2576, 91
      %v2584 = vpop.permute.xlu0 %2583
      %2585 = vrot.lane.b32.xlu0 %v2577, 91
      %v2586 = vpop.permute.xlu0 %2585
      %v2587 = vsel %vm1265, %v2582, %v2584
      %v2588 = vsel %vm1265, %v2584, %v2586
      %v2593 = vadd.f32 %v2567, %v2582
      %v2594 = vadd.f32 %v2568, %v2587
      %v2595 = vadd.f32 %v2569, %v2588
      %v2596 = vadd.f32 %v2570, %v2586
      %2597 = vset.pattern.permute.xlu0 34
      %2598 = vperm.xlu0 %2597, %v1531
      %v2599 = vpop.permute.xlu0 %2598
      %v2601 = vmul.f32 %v2276, %v2599
      %v2602 = vmul.f32 %v2280, %v2599
      %v2603 = vmul.f32 %v2284, %v2599
      %2607 = vrot.lane.b32.xlu0 %v2601, 91
      %v2608 = vpop.permute.xlu0 %2607
      %2609 = vrot.lane.b32.xlu0 %v2602, 91
      %v2610 = vpop.permute.xlu0 %2609
      %2611 = vrot.lane.b32.xlu0 %v2603, 91
      %v2612 = vpop.permute.xlu0 %2611
      %v2613 = vsel %vm1265, %v2608, %v2610
      %v2614 = vsel %vm1265, %v2610, %v2612
      %v2619 = vadd.f32 %v2593, %v2608
      %v2620 = vadd.f32 %v2594, %v2613
      %v2621 = vadd.f32 %v2595, %v2614
      %v2622 = vadd.f32 %v2596, %v2612
      %2623 = vset.pattern.permute.xlu0 8
      %2624 = vperm.xlu0 %2623, %v1531
      %v2625 = vpop.permute.xlu0 %2624
      %v2627 = vmul.f32 %v2117, %v2625
      %v2628 = vmul.f32 %v2121, %v2625
      %v2629 = vmul.f32 %v2125, %v2625
      %2633 = vrot.lane.b32.xlu0 %v2627, 90
      %v2634 = vpop.permute.xlu0 %2633
      %2635 = vrot.lane.b32.xlu0 %v2628, 90
      %v2636 = vpop.permute.xlu0 %2635
      %2637 = vrot.lane.b32.xlu0 %v2629, 90
      %v2638 = vpop.permute.xlu0 %2637
      %v2639 = vsel %vm1370, %v2634, %v2636
      %v2640 = vsel %vm1370, %v2636, %v2638
      %v2645 = vadd.f32 %v2619, %v2634
      %v2646 = vadd.f32 %v2620, %v2639
      %v2647 = vadd.f32 %v2621, %v2640
      %v2648 = vadd.f32 %v2622, %v2638
      %2649 = vset.pattern.permute.xlu0 17
      %2650 = vperm.xlu0 %2649, %v1531
      %v2651 = vpop.permute.xlu0 %2650
      %v2653 = vmul.f32 %v2170, %v2651
      %v2654 = vmul.f32 %v2174, %v2651
      %v2655 = vmul.f32 %v2178, %v2651
      %2659 = vrot.lane.b32.xlu0 %v2653, 90
      %v2660 = vpop.permute.xlu0 %2659
      %2661 = vrot.lane.b32.xlu0 %v2654, 90
      %v2662 = vpop.permute.xlu0 %2661
      %2663 = vrot.lane.b32.xlu0 %v2655, 90
      %v2664 = vpop.permute.xlu0 %2663
      %v2665 = vsel %vm1370, %v2660, %v2662
      %v2666 = vsel %vm1370, %v2662, %v2664
      %v2671 = vadd.f32 %v2645, %v2660
      %v2672 = vadd.f32 %v2646, %v2665
      %v2673 = vadd.f32 %v2647, %v2666
      %v2674 = vadd.f32 %v2648, %v2664
      %2675 = vset.pattern.permute.xlu0 26
      %2676 = vperm.xlu0 %2675, %v1531
      %v2677 = vpop.permute.xlu0 %2676
      %v2679 = vmul.f32 %v2223, %v2677
      %v2680 = vmul.f32 %v2227, %v2677
      %v2681 = vmul.f32 %v2231, %v2677
      %2685 = vrot.lane.b32.xlu0 %v2679, 90
      %v2686 = vpop.permute.xlu0 %2685
      %2687 = vrot.lane.b32.xlu0 %v2680, 90
      %v2688 = vpop.permute.xlu0 %2687
      %2689 = vrot.lane.b32.xlu0 %v2681, 90
      %v2690 = vpop.permute.xlu0 %2689
      %v2691 = vsel %vm1370, %v2686, %v2688
      %v2692 = vsel %vm1370, %v2688, %v2690
      %v2697 = vadd.f32 %v2671, %v2686
      %v2698 = vadd.f32 %v2672, %v2691
      %v2699 = vadd.f32 %v2673, %v2692
      %v2700 = vadd.f32 %v2674, %v2690
      %2701 = vset.pattern.permute.xlu0 35
      %2702 = vperm.xlu0 %2701, %v1531
      %v2703 = vpop.permute.xlu0 %2702
      %v2705 = vmul.f32 %v2276, %v2703
      %v2706 = vmul.f32 %v2280, %v2703
      %v2707 = vmul.f32 %v2284, %v2703
      %2711 = vrot.lane.b32.xlu0 %v2705, 90
      %v2712 = vpop.permute.xlu0 %2711
      %2713 = vrot.lane.b32.xlu0 %v2706, 90
      %v2714 = vpop.permute.xlu0 %2713
      %2715 = vrot.lane.b32.xlu0 %v2707, 90
      %v2716 = vpop.permute.xlu0 %2715
      %v2717 = vsel %vm1370, %v2712, %v2714
      %v2718 = vsel %vm1370, %v2714, %v2716
      %v2723 = vadd.f32 %v2697, %v2712
      %v2724 = vadd.f32 %v2698, %v2717
      %v2725 = vadd.f32 %v2699, %v2718
      %v2726 = vadd.f32 %v2700, %v2716
      %v2727 = vld [vmem:[%s5] sm:$0xf]
      %2729 = vset.pattern.permute.xlu0 0
      %2730 = vperm.xlu0 %2729, %v2727
      %v2731 = vpop.permute.xlu0 %2730
      %v2733 = vadd.f32 %v2723, %v2731
      %v2734 = vadd.f32 %v2724, %v2731
      %v2735 = vadd.f32 %v2725, %v2731
      %v2736 = vadd.f32 %v2726, %v2731
      %v2739 = vcombine.high %v1527, %v1527
      %2740 = vrot.lane.b32.xlu0 %v1527, 109
      %v2741 = vpop.permute.xlu0 %2740
      %2742 = vrot.lane.b32.xlu0 %v2739, 109
      %v2743 = vpop.permute.xlu0 %2742
      %2744 = vrot.lane.b32.xlu0 %v1528, 109
      %v2745 = vpop.permute.xlu0 %2744
      %v2746 = vsel %vm869, %v2741, %v2743
      %v2747 = vsel %vm869, %v2743, %v2745
      %v2752 = vadd.f32 %v2733, %v2741
      %v2753 = vadd.f32 %v2734, %v2746
      %v2754 = vadd.f32 %v2735, %v2747
      %v2755 = vadd.f32 %v2736, %v2745
      %v2756 = vmax.f32 %v2752, 0.0
      %v2757 = vmax.f32 %v2753, 0.0
      %v2758 = vmax.f32 %v2754, 0.0
      %v2759 = vmax.f32 %v2755, 0.0
      %v2760 = vmul.f32 %v2756, %v1487
      %v2761 = vmul.f32 %v2757, %v1492
      %v2762 = vmul.f32 %v2758, %v1493
      %v2763 = vmul.f32 %v2759, %v1491
      %v2768 = vcombine.low %v2760, %v2761
      %v2769 = vcombine.low %v2762, %v2763
      %2770 = vrot.lane.b32.xlu0 %v2768, 19
      %v2771 = vpop.permute.xlu0 %2770
      %2772 = vrot.lane.b32.xlu0 %v2769, 19
      %v2773 = vpop.permute.xlu0 %2772
      %v2774 = vrot.slane %v2771, 4
      %v2775 = vrot.slane %v2773, 4
      %v2776 = vsel %vm1517, %v2774, %v2775
      %v2777 = vsel %vm1519, %v2771, %v2776
      %v2778 = vsel %vm1519, %v2773, %v2775
      %2781 = vst [vmem:[%s251] sm:$0xff] %v2777
      %2782 = vst.msk [vmem:[%s251 + $0x8] sm:$0xf] %vm1525, %v2778
      %p2783 = scmp.lt.s32.totalorder %s17, 1
      %s2784 = scalar_select %p2783, %s17, 1
      %s2785 = smul.addr %s2784, 3
      %s2786 = smul.addr %s2785, 4
      %s2787 = scalar_lea.vmem %s6, %s2786
      // Predicated region
      $region45: #{basic_block_forward.1} parent=43 // pred_check
        %p2788 = pneg %p166
      $region46: #{basic_block_forward.1} parent=43 // pred_check_branch
        %2790 = sbr.rel (%p2788) target = $region48
      $region47: #{basic_block_forward.1} parent=43 // pred_region
        _
      $region48: #{basic_block_forward.1} parent=43 // pred_fallthru
        _
    $region44: #{basic_block_forward.1} parent=5 // pred_fallthru
      _
    %p2791 = scmp.le.s32.totalorder 2, %s12
    // Predicated region
    $region49: #{basic_block_forward.1} parent=5 // pred_check
      %p2792 = pneg %p2791
    $region50: #{basic_block_forward.1} parent=5 // pred_check_branch
      %2794 = sbr.rel (%p2792) target = $region52
    $region51: #{basic_block_forward.1} parent=5 // pred_region
      %s2795 = ssub.s32 %s12, 2
      // Predicated region
      $region53: #{basic_block_forward.1} parent=51 // pred_check
        %p2796 = pneg %p172
      $region54: #{basic_block_forward.1} parent=51 // pred_check_branch
        %2798 = sbr.rel (%p2796) target = $region56
      $region55: #{basic_block_forward.1} parent=51 // pred_region
        %p2799 = scmp.lt.s32.totalorder %s18, 1
        %s2800 = scalar_select %p2799, %s18, 1
        %s2801 = smul.addr %s2800, 3
        %s2802 = smul.addr %s2801, 4
        %s2803 = scalar_lea.vmem %s6, %s2802
      $region56: #{basic_block_forward.1} parent=51 // pred_fallthru
        _
    $region52: #{basic_block_forward.1} parent=5 // pred_fallthru
      _
  $region6: #{basic_block_forward.1} parent=0 // loop_footer
    %s16 = sadd.s32 1, %s12
  $region7: #{basic_block_forward.1} parent=0 // loop_footer_branch
    %11 = sbr.rel target = $region3
  $region8: #{basic_block_forward.1} parent=0 // loop_exit
    _

</llo_original>
